<compile_context>
chip_gen: v7x
topology: tpu7x:2x2x1
jax: 0.10.0
libtpu: 0.0.40
codegen_flags: <defaults>
</compile_context>

<pallas_src>
import functools
import math

import jax
import jax.numpy as jnp
from jax.experimental import pallas as pl
from jax.experimental.pallas import tpu as pltpu

_VMEM_LIMIT = 48 * 1024 * 1024  # v7x-safe headroom; raise toward ~96 MiB on v5e/v6e.


def _round_up(x, m):
    return ((x + m - 1) // m) * m


# ----------------------------------------------------------------------------
# Fused linear kernel:
#   y = act( [LN(x)] @ w + b ) [* layer_scale] [+ residual]
# LayerNorm (when fused) is computed on the x row-tile in the matmul prologue;
# this requires the full K (= hidden) dim to live in a single K tile.
# ----------------------------------------------------------------------------
def _make_linear_kernel(fuse_ln, apply_relu, has_scale, has_residual, ln_eps):
    def kernel(*refs):
        idx = 0
        x_ref = refs[idx]; idx += 1
        if fuse_ln:
            g_ref, bln_ref = refs[idx], refs[idx + 1]; idx += 2
        w_ref, b_ref = refs[idx], refs[idx + 1]; idx += 2
        scale_ref = refs[idx] if has_scale else None
        idx += int(has_scale)
        res_ref = refs[idx] if has_residual else None
        idx += int(has_residual)
        o_ref, acc_ref = refs[idx], refs[idx + 1]

        @pl.when(pl.program_id(2) == 0)
        def _():
            acc_ref[...] = jnp.zeros_like(acc_ref)

        x = x_ref[...]
        if fuse_ln:
            xf = x.astype(jnp.float32)
            mu = jnp.mean(xf, axis=-1, keepdims=True)
            c = xf - mu
            var = jnp.mean(c * c, axis=-1, keepdims=True)
            xn = (c * jax.lax.rsqrt(var + ln_eps)
                  * g_ref[...].astype(jnp.float32)
                  + bln_ref[...].astype(jnp.float32))
            x = xn.astype(x_ref.dtype)

        acc_ref[...] += jnp.dot(x, w_ref[...],
                                preferred_element_type=jnp.float32)

        @pl.when(pl.program_id(2) == pl.num_programs(2) - 1)
        def _():
            out = acc_ref[...] + b_ref[...].astype(jnp.float32)
            if apply_relu:
                out = jnp.maximum(out, 0.0)
            if has_scale:
                out = out * scale_ref[...].astype(jnp.float32)
            if has_residual:
                out = out + res_ref[...].astype(jnp.float32)
            o_ref[...] = out.astype(o_ref.dtype)

    return kernel


def linear_fused(x, w, b, *, ln_gamma=None, ln_beta=None, ln_eps=1e-5,
                 scale=None, residual=None, apply_relu=False,
                 tm_max=512, tn_max=1024, tk_max=512,
                 vmem_limit_bytes=_VMEM_LIMIT):
    """y = act([LN](x) @ w + b) [* scale] [+ residual]; x:(M,K), w:(K,N), b:(N,)."""
    M, K = x.shape
    Kw, N = w.shape
    assert Kw == K
    fuse_ln = ln_gamma is not None
    out_dtype = x.dtype

    # Full extent when small, otherwise (8,128)-aligned max tiles; ragged edge
    # blocks on M/N are masked by Pallas (no wrapper-side pad / slice-back).
    tm = M if M <= tm_max else tm_max
    tn = N if N <= tn_max else tn_max
    if fuse_ln:
        tk, Kp = K, K                       # LN needs the whole row in one K tile.
    else:
        tk = K if K <= tk_max else tk_max
        Kp = _round_up(K, tk)

    xp, wp = x, w
    if Kp != K:                             # zero-pad only K: junk would corrupt the reduction
        xp = jnp.pad(x, ((0, 0), (0, Kp - K)))
        wp = jnp.pad(w, ((0, Kp - K), (0, 0)))

    inputs = [xp]
    in_specs = [pl.BlockSpec((tm, tk), lambda i, j, k: (i, k))]
    if fuse_ln:
        inputs += [ln_gamma.reshape(1, K).astype(jnp.float32),
                   ln_beta.reshape(1, K).astype(jnp.float32)]
        in_specs += [pl.BlockSpec((1, tk), lambda i, j, k: (0, 0)),
                     pl.BlockSpec((1, tk), lambda i, j, k: (0, 0))]
    inputs += [wp, b.reshape(1, N)]
    in_specs += [pl.BlockSpec((tk, tn), lambda i, j, k: (k, j)),
                 pl.BlockSpec((1, tn), lambda i, j, k: (0, j))]
    if scale is not None:
        inputs.append(scale.reshape(1, N).astype(jnp.float32))
        in_specs.append(pl.BlockSpec((1, tn), lambda i, j, k: (0, j)))
    if residual is not None:
        inputs.append(residual)
        in_specs.append(pl.BlockSpec((tm, tn), lambda i, j, k: (i, j)))

    kernel = _make_linear_kernel(fuse_ln, apply_relu, scale is not None,
                                 residual is not None, ln_eps)

    return pl.pallas_call(
        kernel,
        out_shape=jax.ShapeDtypeStruct((M, N), out_dtype),
        grid_spec=pltpu.PrefetchScalarGridSpec(
            num_scalar_prefetch=0,
            grid=(pl.cdiv(M, tm), pl.cdiv(N, tn), Kp // tk),
            in_specs=in_specs,
            out_specs=pl.BlockSpec((tm, tn), lambda i, j, k: (i, j)),
            scratch_shapes=[pltpu.VMEM((tm, tn), jnp.float32)],
        ),
        compiler_params=pltpu.CompilerParams(
            dimension_semantics=("parallel", "parallel", "arbitrary"),
            vmem_limit_bytes=vmem_limit_bytes,
        ),
    )(*inputs)


# ----------------------------------------------------------------------------
# Attention kernel: one batch element per grid step, all heads processed in
# that step; reads the packed [q|k|v] buffer directly and writes (S, H*dk).
# ----------------------------------------------------------------------------
def _attention_kernel(qkv_ref, o_ref, *, num_heads, sm_scale):
    D = o_ref.shape[2]
    dk = D // num_heads
    qkv = qkv_ref[0]                                   # (S, 3D), native dtype to the MXU
    outs = []
    for h in range(num_heads):                         # statically unrolled over heads
        q = qkv[:, h * dk:(h + 1) * dk] * sm_scale     # fold 1/sqrt(dk) into q (S*dk mults)
        k = qkv[:, D + h * dk:D + (h + 1) * dk]
        v = qkv[:, 2 * D + h * dk:2 * D + (h + 1) * dk]
        # contract on dk without materializing a transposed K tile
        s = jax.lax.dot_general(q, k, (((1,), (1,)), ((), ())),
                                preferred_element_type=jnp.float32)        # (S, S)
        m = jnp.max(s, axis=-1, keepdims=True)
        p = jnp.exp(s - m)
        l = jnp.sum(p, axis=-1, keepdims=True)
        o = jax.lax.dot_general(p.astype(v.dtype), v, (((1,), (0,)), ((), ())),
                                preferred_element_type=jnp.float32)        # (S, dk)
        outs.append(o * pl.reciprocal(l, approx=True))                     # EUP slot
    # lane-dense (S, H*dk) output block; no host-side head merge / transpose needed
    o_ref[0] = jnp.concatenate(outs, axis=-1).astype(o_ref.dtype)


def attention(qkv, num_heads, *, vmem_limit_bytes=_VMEM_LIMIT):
    """qkv: (B, S, 3*D) packed [q|k|v] -> (B, S, D) = softmax(QK^T/sqrt(dk))V, no mask."""
    B, S, D3 = qkv.shape
    D = D3 // 3
    sm_scale = 1.0 / math.sqrt(D // num_heads)
    return pl.pallas_call(
        functools.partial(_attention_kernel, num_heads=num_heads, sm_scale=sm_scale),
        out_shape=jax.ShapeDtypeStruct((B, S, D), qkv.dtype),
        grid_spec=pltpu.PrefetchScalarGridSpec(
            num_scalar_prefetch=0,
            grid=(B,),
            in_specs=[pl.BlockSpec((1, S, D3), lambda b: (b, 0, 0))],
            out_specs=pl.BlockSpec((1, S, D), lambda b: (b, 0, 0)),
        ),
        compiler_params=pltpu.CompilerParams(
            dimension_semantics=("parallel",),
            vmem_limit_bytes=vmem_limit_bytes,
        ),
    )(qkv)


# ----------------------------------------------------------------------------
# TransformerLayer forward (inference semantics: dropout = identity)
# ----------------------------------------------------------------------------
def transformer_layer_forward(params, x, num_heads):
    B, S, D = x.shape
    assert D % num_heads == 0
    x2 = x.reshape(B * S, D)

    # --- multi-head attention block (MHA applies its own pre-LayerNorm) ---
    wqkv = jnp.concatenate([params["wq"], params["wk"], params["wv"]], axis=1)
    bqkv = jnp.concatenate([params["bq"], params["bk"], params["bv"]], axis=0)
    # LayerNorm fused into the QKV projection prologue; one MXU pass for q|k|v.
    qkv = linear_fused(x2, wqkv, bqkv,
                       ln_gamma=params["ln_attn_g"], ln_beta=params["ln_attn_b"])
    o = attention(qkv.reshape(B, S, 3 * D), num_heads)          # (B, S, D)

    # Output projection with LayerScale and the residual add fused into the epilogue.
    x1 = linear_fused(o.reshape(B * S, D), params["wo"], params["bo"],
                      scale=params["layer_scale"], residual=x2)

    # --- feed-forward block (norm2 fused into linear1's prologue) ---
    a = linear_fused(x1, params["w1"], params["b1"],
                     ln_gamma=params["ln2_g"], ln_beta=params["ln2_b"],
                     apply_relu=True)
    out = linear_fused(a, params["w2"], params["b2"], residual=x1)
    return out.reshape(B, S, D)


# ----------------------------------------------------------------------------
# Pure-JAX reference (mirrors the PyTorch forward, eval mode)
# ----------------------------------------------------------------------------
def reference_forward(params, x, num_heads):
    hp = jax.lax.Precision.HIGHEST

    def ln(t, g, b, eps=1e-5):
        mu = jnp.mean(t, axis=-1, keepdims=True)
        var = jnp.mean((t - mu) ** 2, axis=-1, keepdims=True)
        return (t - mu) / jnp.sqrt(var + eps) * g + b

    B, S, D = x.shape
    H = num_heads
    dk = D // H
    xn = ln(x, params["ln_attn_g"], params["ln_attn_b"])
    q = jnp.einsum("bsd,de->bse", xn, params["wq"], precision=hp) + params["bq"]
    k = jnp.einsum("bsd,de->bse", xn, params["wk"], precision=hp) + params["bk"]
    v = jnp.einsum("bsd,de->bse", xn, params["wv"], precision=hp) + params["bv"]
    qh = q.reshape(B, S, H, dk).transpose(0, 2, 1, 3)
    kh = k.reshape(B, S, H, dk).transpose(0, 2, 1, 3)
    vh = v.reshape(B, S, H, dk).transpose(0, 2, 1, 3)
    s = jnp.einsum("bhqd,bhkd->bhqk", qh, kh, precision=hp) / math.sqrt(dk)
    p = jax.nn.softmax(s, axis=-1)
    o = jnp.einsum("bhqk,bhkd->bhqd", p, vh, precision=hp)
    o = o.transpose(0, 2, 1, 3).reshape(B, S, D)
    attn_out = (jnp.einsum("bsd,de->bse", o, params["wo"], precision=hp)
                + params["bo"]) * params["layer_scale"]
    x1 = x + attn_out
    h = ln(x1, params["ln2_g"], params["ln2_b"])
    a = jnp.maximum(jnp.einsum("bsd,df->bsf", h, params["w1"], precision=hp)
                    + params["b1"], 0.0)
    return x1 + jnp.einsum("bsf,fd->bsd", a, params["w2"], precision=hp) + params["b2"]


if __name__ == "__main__":
    B, S, D, H = 2, 8, 32, 4
    FF = 4 * D
    key = jax.random.PRNGKey(0)
    ks = jax.random.split(key, 17)

    def rnd(k, shape, scale=0.1):
        return scale * jax.random.normal(k, shape, dtype=jnp.float32)

    params = {
        "ln_attn_g": 1.0 + rnd(ks[0], (D,)),
        "ln_attn_b": rnd(ks[1], (D,)),
        "wq": rnd(ks[2], (D, D)), "bq": rnd(ks[3], (D,)),
        "wk": rnd(ks[4], (D, D)), "bk": rnd(ks[5], (D,)),
        "wv": rnd(ks[6], (D, D)), "bv": rnd(ks[7], (D,)),
        "wo": rnd(ks[8], (D, D)), "bo": rnd(ks[9], (D,)),
        "layer_scale": jnp.ones((D,), jnp.float32) * 1e-4,   # MHA LayerScale init
        "ln2_g": 1.0 + rnd(ks[10], (D,)),
        "ln2_b": rnd(ks[11], (D,)),
        "w1": rnd(ks[12], (D, FF)), "b1": rnd(ks[13], (FF,)),
        "w2": rnd(ks[14], (FF, D)), "b2": rnd(ks[15], (D,)),
    }
    x = jax.random.normal(ks[16], (B, S, D), dtype=jnp.float32)

    fwd = jax.jit(lambda p, xx: transformer_layer_forward(p, xx, H))
    y = jax.block_until_ready(fwd(params, x))

    ref = reference_forward(params, x, H)
    assert y.shape == x.shape
    assert jnp.allclose(y, ref, atol=1e-3, rtol=1e-3), (
        f"max abs err = {float(jnp.max(jnp.abs(y - ref)))}")

    print("KERNEL_OK")
</pallas_src>

<mosaic_0001>
module attributes {stable_mosaic.version = 11 : i64} {
  func.func @kernel(%arg0: i32, %arg1: i32, %arg2: i32, %arg3: memref<16x32xf32, #tpu.memory_space<vmem>>, %arg4: memref<1x32xf32, #tpu.memory_space<vmem>>, %arg5: memref<1x32xf32, #tpu.memory_space<vmem>>, %arg6: memref<32x96xf32, #tpu.memory_space<vmem>>, %arg7: memref<1x96xf32, #tpu.memory_space<vmem>>, %arg8: memref<16x96xf32, #tpu.memory_space<vmem>>, %arg9: memref<16x96xf32, #tpu.memory_space<vmem>>) attributes {dimension_semantics = [#tpu.dimension_semantics<parallel>, #tpu.dimension_semantics<parallel>, #tpu.dimension_semantics<arbitrary>], iteration_bounds = array<i64: 1, 1, 1>, scalar_prefetch = 0 : i64, scratch_operands = 1 : i64, tpu.core_type = #tpu.core_type<tc>, window_params = [{transform_indices = @transform_0, window_bounds = array<i64: 16, 32>}, {pipeline_mode = #tpu.pipeline_mode<synchronous>, transform_indices = @transform_1, window_bounds = array<i64: 1, 32>}, {pipeline_mode = #tpu.pipeline_mode<synchronous>, transform_indices = @transform_2, window_bounds = array<i64: 1, 32>}, {transform_indices = @transform_3, window_bounds = array<i64: 32, 96>}, {transform_indices = @transform_4, window_bounds = array<i64: 1, 96>}, {transform_indices = @transform_5, window_bounds = array<i64: 16, 96>}]} {
    %c0_i32 = arith.constant 0 : i32
    %0 = arith.cmpi eq, %arg2, %c0_i32 : i32
    %1 = arith.extui %0 : i1 to i32
    %c0_i32_0 = arith.constant 0 : i32
    %2 = arith.cmpi ne, %1, %c0_i32_0 : i32
    scf.if %2 {
      %cst_19 = arith.constant 0.000000e+00 : f32
      %34 = vector.broadcast %cst_19 : f32 to vector<16x96xf32>
      %c0_20 = arith.constant 0 : index
      %c0_21 = arith.constant 0 : index
      %35 = vector.load %arg9[%c0_20, %c0_21] : memref<16x96xf32, #tpu.memory_space<vmem>>, vector<16x96xf32>
      tpu.vector_store %arg9[%c0_20, %c0_21], %34 {strides = array<i32>} : memref<16x96xf32, #tpu.memory_space<vmem>>, vector<16x96xf32>,
    } else {
    }
    %c0 = arith.constant 0 : index
    %c0_1 = arith.constant 0 : index
    %3 = vector.load %arg3[%c0, %c0_1] : memref<16x32xf32, #tpu.memory_space<vmem>>, vector<16x32xf32>
    %cst = arith.constant dense<0.000000e+00> : vector<16xf32>
    %4 = vector.multi_reduction <add>, %3, %cst [1] : vector<16x32xf32> to vector<16xf32>
    %5 = vector.shape_cast %4 : vector<16xf32> to vector<16x1xf32>
    %cst_2 = arith.constant 3.200000e+01 : f32
    %6 = vector.broadcast %cst_2 : f32 to vector<16x1xf32>
    %7 = arith.divf %5, %6 : vector<16x1xf32>
    %8 = vector.broadcast %7 : vector<16x1xf32> to vector<16x32xf32>
    %9 = arith.subf %3, %8 : vector<16x32xf32>
    %10 = arith.mulf %9, %9 : vector<16x32xf32>
    %cst_3 = arith.constant dense<0.000000e+00> : vector<16xf32>
    %11 = vector.multi_reduction <add>, %10, %cst_3 [1] : vector<16x32xf32> to vector<16xf32>
    %12 = vector.shape_cast %11 : vector<16xf32> to vector<16x1xf32>
    %cst_4 = arith.constant 3.200000e+01 : f32
    %13 = vector.broadcast %cst_4 : f32 to vector<16x1xf32>
    %14 = arith.divf %12, %13 : vector<16x1xf32>
    %cst_5 = arith.constant 9.99999974E-6 : f32
    %15 = vector.broadcast %cst_5 : f32 to vector<16x1xf32>
    %16 = arith.addf %14, %15 : vector<16x1xf32>
    %17 = math.rsqrt %16 : vector<16x1xf32>
    %18 = vector.broadcast %17 : vector<16x1xf32> to vector<16x32xf32>
    %19 = arith.mulf %9, %18 : vector<16x32xf32>
    %c0_6 = arith.constant 0 : index
    %c0_7 = arith.constant 0 : index
    %20 = vector.load %arg4[%c0_6, %c0_7] : memref<1x32xf32, #tpu.memory_space<vmem>>, vector<1x32xf32>
    %21 = vector.broadcast %20 : vector<1x32xf32> to vector<16x32xf32>
    %22 = arith.mulf %19, %21 : vector<16x32xf32>
    %c0_8 = arith.constant 0 : index
    %c0_9 = arith.constant 0 : index
    %23 = vector.load %arg5[%c0_8, %c0_9] : memref<1x32xf32, #tpu.memory_space<vmem>>, vector<1x32xf32>
    %24 = vector.broadcast %23 : vector<1x32xf32> to vector<16x32xf32>
    %25 = arith.addf %22, %24 : vector<16x32xf32>
    %c0_10 = arith.constant 0 : index
    %c0_11 = arith.constant 0 : index
    %26 = vector.load %arg9[%c0_10, %c0_11] : memref<16x96xf32, #tpu.memory_space<vmem>>, vector<16x96xf32>
    %c0_12 = arith.constant 0 : index
    %c0_13 = arith.constant 0 : index
    %27 = vector.load %arg6[%c0_12, %c0_13] : memref<32x96xf32, #tpu.memory_space<vmem>>, vector<32x96xf32>
    %cst_14 = arith.constant dense<0.000000e+00> : vector<16x96xf32>
    %28 = tpu.matmul %25, %27, %cst_14 {dimension_numbers = #tpu.dot_dimension_numbers<[1], [0], [0], [1], [0, 0, 1, 1], [], []>} : vector<16x32xf32>, vector<32x96xf32>, vector<16x96xf32> -> vector<16x96xf32>
    %29 = arith.addf %26, %28 : vector<16x96xf32>
    %c0_15 = arith.constant 0 : index
    %c0_16 = arith.constant 0 : index
    %30 = vector.load %arg9[%c0_15, %c0_16] : memref<16x96xf32, #tpu.memory_space<vmem>>, vector<16x96xf32>
    tpu.vector_store %arg9[%c0_15, %c0_16], %29 {strides = array<i32>} : memref<16x96xf32, #tpu.memory_space<vmem>>, vector<16x96xf32>,
    %c0_i32_17 = arith.constant 0 : i32
    %31 = arith.cmpi eq, %arg2, %c0_i32_17 : i32
    %32 = arith.extui %31 : i1 to i32
    %c0_i32_18 = arith.constant 0 : i32
    %33 = arith.cmpi ne, %32, %c0_i32_18 : i32
    scf.if %33 {
      %c0_19 = arith.constant 0 : index
      %c0_20 = arith.constant 0 : index
      %34 = vector.load %arg9[%c0_19, %c0_20] : memref<16x96xf32, #tpu.memory_space<vmem>>, vector<16x96xf32>
      %c0_21 = arith.constant 0 : index
      %c0_22 = arith.constant 0 : index
      %35 = vector.load %arg7[%c0_21, %c0_22] : memref<1x96xf32, #tpu.memory_space<vmem>>, vector<1x96xf32>
      %36 = vector.broadcast %35 : vector<1x96xf32> to vector<16x96xf32>
      %37 = arith.addf %34, %36 : vector<16x96xf32>
      %c0_23 = arith.constant 0 : index
      %c0_24 = arith.constant 0 : index
      %38 = vector.load %arg8[%c0_23, %c0_24] : memref<16x96xf32, #tpu.memory_space<vmem>>, vector<16x96xf32>
      tpu.vector_store %arg8[%c0_23, %c0_24], %37 {strides = array<i32>} : memref<16x96xf32, #tpu.memory_space<vmem>>, vector<16x96xf32>,
    } else {
    }
    return
  }
  func.func @transform_0(%arg0: i32, %arg1: i32, %arg2: i32) -> (i32, i32) {
    %c0_i32 = arith.constant 0 : i32
    return %arg0, %arg2 : i32, i32
  }
  func.func @transform_1(%arg0: i32, %arg1: i32, %arg2: i32) -> (i32, i32) {
    %c0_i32 = arith.constant 0 : i32
    %c0_i32_0 = arith.constant 0 : i32
    %c0_i32_1 = arith.constant 0 : i32
    return %c0_i32, %c0_i32_0 : i32, i32
  }
  func.func @transform_2(%arg0: i32, %arg1: i32, %arg2: i32) -> (i32, i32) {
    %c0_i32 = arith.constant 0 : i32
    %c0_i32_0 = arith.constant 0 : i32
    %c0_i32_1 = arith.constant 0 : i32
    return %c0_i32, %c0_i32_0 : i32, i32
  }
  func.func @transform_3(%arg0: i32, %arg1: i32, %arg2: i32) -> (i32, i32) {
    %c0_i32 = arith.constant 0 : i32
    return %arg2, %arg1 : i32, i32
  }
  func.func @transform_4(%arg0: i32, %arg1: i32, %arg2: i32) -> (i32, i32) {
    %c0_i32 = arith.constant 0 : i32
    %c0_i32_0 = arith.constant 0 : i32
    return %c0_i32, %arg1 : i32, i32
  }
  func.func @transform_5(%arg0: i32, %arg1: i32, %arg2: i32) -> (i32, i32) {
    %c0_i32 = arith.constant 0 : i32
    return %arg0, %arg1 : i32, i32
  }
}

module attributes {stable_mosaic.version = 11 : i64} {
  func.func @_attention_kernel(%arg0: i32, %arg1: memref<1x8x96xf32, #tpu.memory_space<vmem>>, %arg2: memref<1x8x32xf32, #tpu.memory_space<vmem>>) attributes {dimension_semantics = [#tpu.dimension_semantics<parallel>], iteration_bounds = array<i64: 2>, scalar_prefetch = 0 : i64, scratch_operands = 0 : i64, tpu.core_type = #tpu.core_type<tc>, window_params = [{transform_indices = @transform_0, window_bounds = array<i64: 1, 8, 96>}, {transform_indices = @transform_1, window_bounds = array<i64: 1, 8, 32>}]} {
    %c0 = arith.constant 0 : index
    %c0_0 = arith.constant 0 : index
    %c0_1 = arith.constant 0 : index
    %0 = vector.load %arg1[%c0, %c0_0, %c0_1] : memref<1x8x96xf32, #tpu.memory_space<vmem>>, vector<1x8x96xf32>
    %1 = vector.shape_cast %0 : vector<1x8x96xf32> to vector<8x96xf32>
    %2 = vector.extract_strided_slice %1 {offsets = [0, 0], sizes = [8, 8], strides = [1, 1]} : vector<8x96xf32> to vector<8x8xf32>
    %cst = arith.constant 0.353553385 : f32
    %3 = vector.broadcast %cst : f32 to vector<8x8xf32>
    %4 = arith.mulf %2, %3 : vector<8x8xf32>
    %5 = vector.extract_strided_slice %1 {offsets = [0, 32], sizes = [8, 8], strides = [1, 1]} : vector<8x96xf32> to vector<8x8xf32>
    %6 = vector.extract_strided_slice %1 {offsets = [0, 64], sizes = [8, 8], strides = [1, 1]} : vector<8x96xf32> to vector<8x8xf32>
    %cst_2 = arith.constant dense<0.000000e+00> : vector<8x8xf32>
    %7 = tpu.matmul %4, %5, %cst_2 {dimension_numbers = #tpu.dot_dimension_numbers<[1], [1], [0], [0], [0, 0, 1, 0], [], []>} : vector<8x8xf32>, vector<8x8xf32>, vector<8x8xf32> -> vector<8x8xf32>
    %cst_3 = arith.constant dense<0xFF800000> : vector<8xf32>
    %8 = vector.multi_reduction <maximumf>, %7, %cst_3 [1] : vector<8x8xf32> to vector<8xf32>
    %9 = vector.shape_cast %8 : vector<8xf32> to vector<8x1xf32>
    %10 = vector.broadcast %9 : vector<8x1xf32> to vector<8x8xf32>
    %11 = arith.subf %7, %10 : vector<8x8xf32>
    %12 = math.exp %11 : vector<8x8xf32>
    %cst_4 = arith.constant dense<0.000000e+00> : vector<8xf32>
    %13 = vector.multi_reduction <add>, %12, %cst_4 [1] : vector<8x8xf32> to vector<8xf32>
    %14 = vector.shape_cast %13 : vector<8xf32> to vector<8x1xf32>
    %cst_5 = arith.constant dense<0.000000e+00> : vector<8x8xf32>
    %15 = tpu.matmul %12, %6, %cst_5 {dimension_numbers = #tpu.dot_dimension_numbers<[1], [0], [0], [1], [0, 0, 1, 1], [], []>} : vector<8x8xf32>, vector<8x8xf32>, vector<8x8xf32> -> vector<8x8xf32>
    %16 = tpu.reciprocal %14 {approx = true} : vector<8x1xf32> -> vector<8x1xf32>
    %17 = vector.broadcast %16 : vector<8x1xf32> to vector<8x8xf32>
    %18 = arith.mulf %15, %17 : vector<8x8xf32>
    %19 = vector.extract_strided_slice %1 {offsets = [0, 8], sizes = [8, 8], strides = [1, 1]} : vector<8x96xf32> to vector<8x8xf32>
    %cst_6 = arith.constant 0.353553385 : f32
    %20 = vector.broadcast %cst_6 : f32 to vector<8x8xf32>
    %21 = arith.mulf %19, %20 : vector<8x8xf32>
    %22 = vector.extract_strided_slice %1 {offsets = [0, 40], sizes = [8, 8], strides = [1, 1]} : vector<8x96xf32> to vector<8x8xf32>
    %23 = vector.extract_strided_slice %1 {offsets = [0, 72], sizes = [8, 8], strides = [1, 1]} : vector<8x96xf32> to vector<8x8xf32>
    %cst_7 = arith.constant dense<0.000000e+00> : vector<8x8xf32>
    %24 = tpu.matmul %21, %22, %cst_7 {dimension_numbers = #tpu.dot_dimension_numbers<[1], [1], [0], [0], [0, 0, 1, 0], [], []>} : vector<8x8xf32>, vector<8x8xf32>, vector<8x8xf32> -> vector<8x8xf32>
    %cst_8 = arith.constant dense<0xFF800000> : vector<8xf32>
    %25 = vector.multi_reduction <maximumf>, %24, %cst_8 [1] : vector<8x8xf32> to vector<8xf32>
    %26 = vector.shape_cast %25 : vector<8xf32> to vector<8x1xf32>
    %27 = vector.broadcast %26 : vector<8x1xf32> to vector<8x8xf32>
    %28 = arith.subf %24, %27 : vector<8x8xf32>
    %29 = math.exp %28 : vector<8x8xf32>
    %cst_9 = arith.constant dense<0.000000e+00> : vector<8xf32>
    %30 = vector.multi_reduction <add>, %29, %cst_9 [1] : vector<8x8xf32> to vector<8xf32>
    %31 = vector.shape_cast %30 : vector<8xf32> to vector<8x1xf32>
    %cst_10 = arith.constant dense<0.000000e+00> : vector<8x8xf32>
    %32 = tpu.matmul %29, %23, %cst_10 {dimension_numbers = #tpu.dot_dimension_numbers<[1], [0], [0], [1], [0, 0, 1, 1], [], []>} : vector<8x8xf32>, vector<8x8xf32>, vector<8x8xf32> -> vector<8x8xf32>
    %33 = tpu.reciprocal %31 {approx = true} : vector<8x1xf32> -> vector<8x1xf32>
    %34 = vector.broadcast %33 : vector<8x1xf32> to vector<8x8xf32>
    %35 = arith.mulf %32, %34 : vector<8x8xf32>
    %36 = vector.extract_strided_slice %1 {offsets = [0, 16], sizes = [8, 8], strides = [1, 1]} : vector<8x96xf32> to vector<8x8xf32>
    %cst_11 = arith.constant 0.353553385 : f32
    %37 = vector.broadcast %cst_11 : f32 to vector<8x8xf32>
    %38 = arith.mulf %36, %37 : vector<8x8xf32>
    %39 = vector.extract_strided_slice %1 {offsets = [0, 48], sizes = [8, 8], strides = [1, 1]} : vector<8x96xf32> to vector<8x8xf32>
    %40 = vector.extract_strided_slice %1 {offsets = [0, 80], sizes = [8, 8], strides = [1, 1]} : vector<8x96xf32> to vector<8x8xf32>
    %cst_12 = arith.constant dense<0.000000e+00> : vector<8x8xf32>
    %41 = tpu.matmul %38, %39, %cst_12 {dimension_numbers = #tpu.dot_dimension_numbers<[1], [1], [0], [0], [0, 0, 1, 0], [], []>} : vector<8x8xf32>, vector<8x8xf32>, vector<8x8xf32> -> vector<8x8xf32>
    %cst_13 = arith.constant dense<0xFF800000> : vector<8xf32>
    %42 = vector.multi_reduction <maximumf>, %41, %cst_13 [1] : vector<8x8xf32> to vector<8xf32>
    %43 = vector.shape_cast %42 : vector<8xf32> to vector<8x1xf32>
    %44 = vector.broadcast %43 : vector<8x1xf32> to vector<8x8xf32>
    %45 = arith.subf %41, %44 : vector<8x8xf32>
    %46 = math.exp %45 : vector<8x8xf32>
    %cst_14 = arith.constant dense<0.000000e+00> : vector<8xf32>
    %47 = vector.multi_reduction <add>, %46, %cst_14 [1] : vector<8x8xf32> to vector<8xf32>
    %48 = vector.shape_cast %47 : vector<8xf32> to vector<8x1xf32>
    %cst_15 = arith.constant dense<0.000000e+00> : vector<8x8xf32>
    %49 = tpu.matmul %46, %40, %cst_15 {dimension_numbers = #tpu.dot_dimension_numbers<[1], [0], [0], [1], [0, 0, 1, 1], [], []>} : vector<8x8xf32>, vector<8x8xf32>, vector<8x8xf32> -> vector<8x8xf32>
    %50 = tpu.reciprocal %48 {approx = true} : vector<8x1xf32> -> vector<8x1xf32>
    %51 = vector.broadcast %50 : vector<8x1xf32> to vector<8x8xf32>
    %52 = arith.mulf %49, %51 : vector<8x8xf32>
    %53 = vector.extract_strided_slice %1 {offsets = [0, 24], sizes = [8, 8], strides = [1, 1]} : vector<8x96xf32> to vector<8x8xf32>
    %cst_16 = arith.constant 0.353553385 : f32
    %54 = vector.broadcast %cst_16 : f32 to vector<8x8xf32>
    %55 = arith.mulf %53, %54 : vector<8x8xf32>
    %56 = vector.extract_strided_slice %1 {offsets = [0, 56], sizes = [8, 8], strides = [1, 1]} : vector<8x96xf32> to vector<8x8xf32>
    %57 = vector.extract_strided_slice %1 {offsets = [0, 88], sizes = [8, 8], strides = [1, 1]} : vector<8x96xf32> to vector<8x8xf32>
    %cst_17 = arith.constant dense<0.000000e+00> : vector<8x8xf32>
    %58 = tpu.matmul %55, %56, %cst_17 {dimension_numbers = #tpu.dot_dimension_numbers<[1], [1], [0], [0], [0, 0, 1, 0], [], []>} : vector<8x8xf32>, vector<8x8xf32>, vector<8x8xf32> -> vector<8x8xf32>
    %cst_18 = arith.constant dense<0xFF800000> : vector<8xf32>
    %59 = vector.multi_reduction <maximumf>, %58, %cst_18 [1] : vector<8x8xf32> to vector<8xf32>
    %60 = vector.shape_cast %59 : vector<8xf32> to vector<8x1xf32>
    %61 = vector.broadcast %60 : vector<8x1xf32> to vector<8x8xf32>
    %62 = arith.subf %58, %61 : vector<8x8xf32>
    %63 = math.exp %62 : vector<8x8xf32>
    %cst_19 = arith.constant dense<0.000000e+00> : vector<8xf32>
    %64 = vector.multi_reduction <add>, %63, %cst_19 [1] : vector<8x8xf32> to vector<8xf32>
    %65 = vector.shape_cast %64 : vector<8xf32> to vector<8x1xf32>
    %cst_20 = arith.constant dense<0.000000e+00> : vector<8x8xf32>
    %66 = tpu.matmul %63, %57, %cst_20 {dimension_numbers = #tpu.dot_dimension_numbers<[1], [0], [0], [1], [0, 0, 1, 1], [], []>} : vector<8x8xf32>, vector<8x8xf32>, vector<8x8xf32> -> vector<8x8xf32>
    %67 = tpu.reciprocal %65 {approx = true} : vector<8x1xf32> -> vector<8x1xf32>
    %68 = vector.broadcast %67 : vector<8x1xf32> to vector<8x8xf32>
    %69 = arith.mulf %66, %68 : vector<8x8xf32>
    %70 = tpu.concatenate %18, %35, %52, %69 in 1 : vector<8x8xf32>, vector<8x8xf32>, vector<8x8xf32>, vector<8x8xf32> -> vector<8x32xf32>
    %c0_21 = arith.constant 0 : index
    %c0_22 = arith.constant 0 : index
    %c0_23 = arith.constant 0 : index
    %71 = vector.load %arg2[%c0_21, %c0_22, %c0_23] : memref<1x8x32xf32, #tpu.memory_space<vmem>>, vector<1x8x32xf32>
    %72 = vector.shape_cast %71 : vector<1x8x32xf32> to vector<8x32xf32>
    %73 = vector.shape_cast %70 : vector<8x32xf32> to vector<1x8x32xf32>
    tpu.vector_store %arg2[%c0_21, %c0_22, %c0_23], %73 {strides = array<i32>} : memref<1x8x32xf32, #tpu.memory_space<vmem>>, vector<1x8x32xf32>,
    return
  }
  func.func @transform_0(%arg0: i32) -> (i32, i32, i32) {
    %c0_i32 = arith.constant 0 : i32
    %c0_i32_0 = arith.constant 0 : i32
    %c0_i32_1 = arith.constant 0 : i32
    return %arg0, %c0_i32, %c0_i32_0 : i32, i32, i32
  }
  func.func @transform_1(%arg0: i32) -> (i32, i32, i32) {
    %c0_i32 = arith.constant 0 : i32
    %c0_i32_0 = arith.constant 0 : i32
    %c0_i32_1 = arith.constant 0 : i32
    return %arg0, %c0_i32, %c0_i32_0 : i32, i32, i32
  }
}

module attributes {stable_mosaic.version = 11 : i64} {
  func.func @kernel(%arg0: i32, %arg1: i32, %arg2: i32, %arg3: memref<16x32xf32, #tpu.memory_space<vmem>>, %arg4: memref<32x32xf32, #tpu.memory_space<vmem>>, %arg5: memref<1x32xf32, #tpu.memory_space<vmem>>, %arg6: memref<1x32xf32, #tpu.memory_space<vmem>>, %arg7: memref<16x32xf32, #tpu.memory_space<vmem>>, %arg8: memref<16x32xf32, #tpu.memory_space<vmem>>, %arg9: memref<16x32xf32, #tpu.memory_space<vmem>>) attributes {dimension_semantics = [#tpu.dimension_semantics<parallel>, #tpu.dimension_semantics<parallel>, #tpu.dimension_semantics<arbitrary>], iteration_bounds = array<i64: 1, 1, 1>, scalar_prefetch = 0 : i64, scratch_operands = 1 : i64, tpu.core_type = #tpu.core_type<tc>, window_params = [{transform_indices = @transform_0, window_bounds = array<i64: 16, 32>}, {transform_indices = @transform_1, window_bounds = array<i64: 32, 32>}, {transform_indices = @transform_2, window_bounds = array<i64: 1, 32>}, {transform_indices = @transform_3, window_bounds = array<i64: 1, 32>}, {transform_indices = @transform_4, window_bounds = array<i64: 16, 32>}, {transform_indices = @transform_5, window_bounds = array<i64: 16, 32>}]} {
    %c0_i32 = arith.constant 0 : i32
    %0 = arith.cmpi eq, %arg2, %c0_i32 : i32
    %1 = arith.extui %0 : i1 to i32
    %c0_i32_0 = arith.constant 0 : i32
    %2 = arith.cmpi ne, %1, %c0_i32_0 : i32
    scf.if %2 {
      %cst_10 = arith.constant 0.000000e+00 : f32
      %12 = vector.broadcast %cst_10 : f32 to vector<16x32xf32>
      %c0_11 = arith.constant 0 : index
      %c0_12 = arith.constant 0 : index
      %13 = vector.load %arg9[%c0_11, %c0_12] : memref<16x32xf32, #tpu.memory_space<vmem>>, vector<16x32xf32>
      tpu.vector_store %arg9[%c0_11, %c0_12], %12 {strides = array<i32>} : memref<16x32xf32, #tpu.memory_space<vmem>>, vector<16x32xf32>,
    } else {
    }
    %c0 = arith.constant 0 : index
    %c0_1 = arith.constant 0 : index
    %3 = vector.load %arg3[%c0, %c0_1] : memref<16x32xf32, #tpu.memory_space<vmem>>, vector<16x32xf32>
    %c0_2 = arith.constant 0 : index
    %c0_3 = arith.constant 0 : index
    %4 = vector.load %arg9[%c0_2, %c0_3] : memref<16x32xf32, #tpu.memory_space<vmem>>, vector<16x32xf32>
    %c0_4 = arith.constant 0 : index
    %c0_5 = arith.constant 0 : index
    %5 = vector.load %arg4[%c0_4, %c0_5] : memref<32x32xf32, #tpu.memory_space<vmem>>, vector<32x32xf32>
    %cst = arith.constant dense<0.000000e+00> : vector<16x32xf32>
    %6 = tpu.matmul %3, %5, %cst {dimension_numbers = #tpu.dot_dimension_numbers<[1], [0], [0], [1], [0, 0, 1, 1], [], []>} : vector<16x32xf32>, vector<32x32xf32>, vector<16x32xf32> -> vector<16x32xf32>
    %7 = arith.addf %4, %6 : vector<16x32xf32>
    %c0_6 = arith.constant 0 : index
    %c0_7 = arith.constant 0 : index
    %8 = vector.load %arg9[%c0_6, %c0_7] : memref<16x32xf32, #tpu.memory_space<vmem>>, vector<16x32xf32>
    tpu.vector_store %arg9[%c0_6, %c0_7], %7 {strides = array<i32>} : memref<16x32xf32, #tpu.memory_space<vmem>>, vector<16x32xf32>,
    %c0_i32_8 = arith.constant 0 : i32
    %9 = arith.cmpi eq, %arg2, %c0_i32_8 : i32
    %10 = arith.extui %9 : i1 to i32
    %c0_i32_9 = arith.constant 0 : i32
    %11 = arith.cmpi ne, %10, %c0_i32_9 : i32
    scf.if %11 {
      %c0_10 = arith.constant 0 : index
      %c0_11 = arith.constant 0 : index
      %12 = vector.load %arg9[%c0_10, %c0_11] : memref<16x32xf32, #tpu.memory_space<vmem>>, vector<16x32xf32>
      %c0_12 = arith.constant 0 : index
      %c0_13 = arith.constant 0 : index
      %13 = vector.load %arg5[%c0_12, %c0_13] : memref<1x32xf32, #tpu.memory_space<vmem>>, vector<1x32xf32>
      %14 = vector.broadcast %13 : vector<1x32xf32> to vector<16x32xf32>
      %15 = arith.addf %12, %14 : vector<16x32xf32>
      %c0_14 = arith.constant 0 : index
      %c0_15 = arith.constant 0 : index
      %16 = vector.load %arg6[%c0_14, %c0_15] : memref<1x32xf32, #tpu.memory_space<vmem>>, vector<1x32xf32>
      %17 = vector.broadcast %16 : vector<1x32xf32> to vector<16x32xf32>
      %18 = arith.mulf %15, %17 : vector<16x32xf32>
      %c0_16 = arith.constant 0 : index
      %c0_17 = arith.constant 0 : index
      %19 = vector.load %arg7[%c0_16, %c0_17] : memref<16x32xf32, #tpu.memory_space<vmem>>, vector<16x32xf32>
      %20 = arith.addf %18, %19 : vector<16x32xf32>
      %c0_18 = arith.constant 0 : index
      %c0_19 = arith.constant 0 : index
      %21 = vector.load %arg8[%c0_18, %c0_19] : memref<16x32xf32, #tpu.memory_space<vmem>>, vector<16x32xf32>
      tpu.vector_store %arg8[%c0_18, %c0_19], %20 {strides = array<i32>} : memref<16x32xf32, #tpu.memory_space<vmem>>, vector<16x32xf32>,
    } else {
    }
    return
  }
  func.func @transform_0(%arg0: i32, %arg1: i32, %arg2: i32) -> (i32, i32) {
    %c0_i32 = arith.constant 0 : i32
    return %arg0, %arg2 : i32, i32
  }
  func.func @transform_1(%arg0: i32, %arg1: i32, %arg2: i32) -> (i32, i32) {
    %c0_i32 = arith.constant 0 : i32
    return %arg2, %arg1 : i32, i32
  }
  func.func @transform_2(%arg0: i32, %arg1: i32, %arg2: i32) -> (i32, i32) {
    %c0_i32 = arith.constant 0 : i32
    %c0_i32_0 = arith.constant 0 : i32
    return %c0_i32, %arg1 : i32, i32
  }
  func.func @transform_3(%arg0: i32, %arg1: i32, %arg2: i32) -> (i32, i32) {
    %c0_i32 = arith.constant 0 : i32
    %c0_i32_0 = arith.constant 0 : i32
    return %c0_i32, %arg1 : i32, i32
  }
  func.func @transform_4(%arg0: i32, %arg1: i32, %arg2: i32) -> (i32, i32) {
    %c0_i32 = arith.constant 0 : i32
    return %arg0, %arg1 : i32, i32
  }
  func.func @transform_5(%arg0: i32, %arg1: i32, %arg2: i32) -> (i32, i32) {
    %c0_i32 = arith.constant 0 : i32
    return %arg0, %arg1 : i32, i32
  }
}

module attributes {stable_mosaic.version = 11 : i64} {
  func.func @kernel(%arg0: i32, %arg1: i32, %arg2: i32, %arg3: memref<16x32xf32, #tpu.memory_space<vmem>>, %arg4: memref<1x32xf32, #tpu.memory_space<vmem>>, %arg5: memref<1x32xf32, #tpu.memory_space<vmem>>, %arg6: memref<32x128xf32, #tpu.memory_space<vmem>>, %arg7: memref<1x128xf32, #tpu.memory_space<vmem>>, %arg8: memref<16x128xf32, #tpu.memory_space<vmem>>, %arg9: memref<16x128xf32, #tpu.memory_space<vmem>>) attributes {dimension_semantics = [#tpu.dimension_semantics<parallel>, #tpu.dimension_semantics<parallel>, #tpu.dimension_semantics<arbitrary>], iteration_bounds = array<i64: 1, 1, 1>, scalar_prefetch = 0 : i64, scratch_operands = 1 : i64, tpu.core_type = #tpu.core_type<tc>, window_params = [{transform_indices = @transform_0, window_bounds = array<i64: 16, 32>}, {pipeline_mode = #tpu.pipeline_mode<synchronous>, transform_indices = @transform_1, window_bounds = array<i64: 1, 32>}, {pipeline_mode = #tpu.pipeline_mode<synchronous>, transform_indices = @transform_2, window_bounds = array<i64: 1, 32>}, {transform_indices = @transform_3, window_bounds = array<i64: 32, 128>}, {transform_indices = @transform_4, window_bounds = array<i64: 1, 128>}, {transform_indices = @transform_5, window_bounds = array<i64: 16, 128>}]} {
    %c0_i32 = arith.constant 0 : i32
    %0 = arith.cmpi eq, %arg2, %c0_i32 : i32
    %1 = arith.extui %0 : i1 to i32
    %c0_i32_0 = arith.constant 0 : i32
    %2 = arith.cmpi ne, %1, %c0_i32_0 : i32
    scf.if %2 {
      %cst_19 = arith.constant 0.000000e+00 : f32
      %34 = vector.broadcast %cst_19 : f32 to vector<16x128xf32>
      %c0_20 = arith.constant 0 : index
      %c0_21 = arith.constant 0 : index
      %35 = vector.load %arg9[%c0_20, %c0_21] : memref<16x128xf32, #tpu.memory_space<vmem>>, vector<16x128xf32>
      tpu.vector_store %arg9[%c0_20, %c0_21], %34 {strides = array<i32>} : memref<16x128xf32, #tpu.memory_space<vmem>>, vector<16x128xf32>,
    } else {
    }
    %c0 = arith.constant 0 : index
    %c0_1 = arith.constant 0 : index
    %3 = vector.load %arg3[%c0, %c0_1] : memref<16x32xf32, #tpu.memory_space<vmem>>, vector<16x32xf32>
    %cst = arith.constant dense<0.000000e+00> : vector<16xf32>
    %4 = vector.multi_reduction <add>, %3, %cst [1] : vector<16x32xf32> to vector<16xf32>
    %5 = vector.shape_cast %4 : vector<16xf32> to vector<16x1xf32>
    %cst_2 = arith.constant 3.200000e+01 : f32
    %6 = vector.broadcast %cst_2 : f32 to vector<16x1xf32>
    %7 = arith.divf %5, %6 : vector<16x1xf32>
    %8 = vector.broadcast %7 : vector<16x1xf32> to vector<16x32xf32>
    %9 = arith.subf %3, %8 : vector<16x32xf32>
    %10 = arith.mulf %9, %9 : vector<16x32xf32>
    %cst_3 = arith.constant dense<0.000000e+00> : vector<16xf32>
    %11 = vector.multi_reduction <add>, %10, %cst_3 [1] : vector<16x32xf32> to vector<16xf32>
    %12 = vector.shape_cast %11 : vector<16xf32> to vector<16x1xf32>
    %cst_4 = arith.constant 3.200000e+01 : f32
    %13 = vector.broadcast %cst_4 : f32 to vector<16x1xf32>
    %14 = arith.divf %12, %13 : vector<16x1xf32>
    %cst_5 = arith.constant 9.99999974E-6 : f32
    %15 = vector.broadcast %cst_5 : f32 to vector<16x1xf32>
    %16 = arith.addf %14, %15 : vector<16x1xf32>
    %17 = math.rsqrt %16 : vector<16x1xf32>
    %18 = vector.broadcast %17 : vector<16x1xf32> to vector<16x32xf32>
    %19 = arith.mulf %9, %18 : vector<16x32xf32>
    %c0_6 = arith.constant 0 : index
    %c0_7 = arith.constant 0 : index
    %20 = vector.load %arg4[%c0_6, %c0_7] : memref<1x32xf32, #tpu.memory_space<vmem>>, vector<1x32xf32>
    %21 = vector.broadcast %20 : vector<1x32xf32> to vector<16x32xf32>
    %22 = arith.mulf %19, %21 : vector<16x32xf32>
    %c0_8 = arith.constant 0 : index
    %c0_9 = arith.constant 0 : index
    %23 = vector.load %arg5[%c0_8, %c0_9] : memref<1x32xf32, #tpu.memory_space<vmem>>, vector<1x32xf32>
    %24 = vector.broadcast %23 : vector<1x32xf32> to vector<16x32xf32>
    %25 = arith.addf %22, %24 : vector<16x32xf32>
    %c0_10 = arith.constant 0 : index
    %c0_11 = arith.constant 0 : index
    %26 = vector.load %arg9[%c0_10, %c0_11] : memref<16x128xf32, #tpu.memory_space<vmem>>, vector<16x128xf32>
    %c0_12 = arith.constant 0 : index
    %c0_13 = arith.constant 0 : index
    %27 = vector.load %arg6[%c0_12, %c0_13] : memref<32x128xf32, #tpu.memory_space<vmem>>, vector<32x128xf32>
    %cst_14 = arith.constant dense<0.000000e+00> : vector<16x128xf32>
    %28 = tpu.matmul %25, %27, %cst_14 {dimension_numbers = #tpu.dot_dimension_numbers<[1], [0], [0], [1], [0, 0, 1, 1], [], []>} : vector<16x32xf32>, vector<32x128xf32>, vector<16x128xf32> -> vector<16x128xf32>
    %29 = arith.addf %26, %28 : vector<16x128xf32>
    %c0_15 = arith.constant 0 : index
    %c0_16 = arith.constant 0 : index
    %30 = vector.load %arg9[%c0_15, %c0_16] : memref<16x128xf32, #tpu.memory_space<vmem>>, vector<16x128xf32>
    tpu.vector_store %arg9[%c0_15, %c0_16], %29 {strides = array<i32>} : memref<16x128xf32, #tpu.memory_space<vmem>>, vector<16x128xf32>,
    %c0_i32_17 = arith.constant 0 : i32
    %31 = arith.cmpi eq, %arg2, %c0_i32_17 : i32
    %32 = arith.extui %31 : i1 to i32
    %c0_i32_18 = arith.constant 0 : i32
    %33 = arith.cmpi ne, %32, %c0_i32_18 : i32
    scf.if %33 {
      %c0_19 = arith.constant 0 : index
      %c0_20 = arith.constant 0 : index
      %34 = vector.load %arg9[%c0_19, %c0_20] : memref<16x128xf32, #tpu.memory_space<vmem>>, vector<16x128xf32>
      %c0_21 = arith.constant 0 : index
      %c0_22 = arith.constant 0 : index
      %35 = vector.load %arg7[%c0_21, %c0_22] : memref<1x128xf32, #tpu.memory_space<vmem>>, vector<1x128xf32>
      %36 = vector.broadcast %35 : vector<1x128xf32> to vector<16x128xf32>
      %37 = arith.addf %34, %36 : vector<16x128xf32>
      %cst_23 = arith.constant 0.000000e+00 : f32
      %38 = vector.broadcast %cst_23 : f32 to vector<16x128xf32>
      %39 = arith.maximumf %37, %38 : vector<16x128xf32>
      %c0_24 = arith.constant 0 : index
      %c0_25 = arith.constant 0 : index
      %40 = vector.load %arg8[%c0_24, %c0_25] : memref<16x128xf32, #tpu.memory_space<vmem>>, vector<16x128xf32>
      tpu.vector_store %arg8[%c0_24, %c0_25], %39 {strides = array<i32>} : memref<16x128xf32, #tpu.memory_space<vmem>>, vector<16x128xf32>,
    } else {
    }
    return
  }
  func.func @transform_0(%arg0: i32, %arg1: i32, %arg2: i32) -> (i32, i32) {
    %c0_i32 = arith.constant 0 : i32
    return %arg0, %arg2 : i32, i32
  }
  func.func @transform_1(%arg0: i32, %arg1: i32, %arg2: i32) -> (i32, i32) {
    %c0_i32 = arith.constant 0 : i32
    %c0_i32_0 = arith.constant 0 : i32
    %c0_i32_1 = arith.constant 0 : i32
    return %c0_i32, %c0_i32_0 : i32, i32
  }
  func.func @transform_2(%arg0: i32, %arg1: i32, %arg2: i32) -> (i32, i32) {
    %c0_i32 = arith.constant 0 : i32
    %c0_i32_0 = arith.constant 0 : i32
    %c0_i32_1 = arith.constant 0 : i32
    return %c0_i32, %c0_i32_0 : i32, i32
  }
  func.func @transform_3(%arg0: i32, %arg1: i32, %arg2: i32) -> (i32, i32) {
    %c0_i32 = arith.constant 0 : i32
    return %arg2, %arg1 : i32, i32
  }
  func.func @transform_4(%arg0: i32, %arg1: i32, %arg2: i32) -> (i32, i32) {
    %c0_i32 = arith.constant 0 : i32
    %c0_i32_0 = arith.constant 0 : i32
    return %c0_i32, %arg1 : i32, i32
  }
  func.func @transform_5(%arg0: i32, %arg1: i32, %arg2: i32) -> (i32, i32) {
    %c0_i32 = arith.constant 0 : i32
    return %arg0, %arg1 : i32, i32
  }
}

module attributes {stable_mosaic.version = 11 : i64} {
  func.func @kernel(%arg0: i32, %arg1: i32, %arg2: i32, %arg3: memref<16x128xf32, #tpu.memory_space<vmem>>, %arg4: memref<128x32xf32, #tpu.memory_space<vmem>>, %arg5: memref<1x32xf32, #tpu.memory_space<vmem>>, %arg6: memref<16x32xf32, #tpu.memory_space<vmem>>, %arg7: memref<16x32xf32, #tpu.memory_space<vmem>>, %arg8: memref<16x32xf32, #tpu.memory_space<vmem>>) attributes {dimension_semantics = [#tpu.dimension_semantics<parallel>, #tpu.dimension_semantics<parallel>, #tpu.dimension_semantics<arbitrary>], iteration_bounds = array<i64: 1, 1, 1>, scalar_prefetch = 0 : i64, scratch_operands = 1 : i64, tpu.core_type = #tpu.core_type<tc>, window_params = [{transform_indices = @transform_0, window_bounds = array<i64: 16, 128>}, {transform_indices = @transform_1, window_bounds = array<i64: 128, 32>}, {transform_indices = @transform_2, window_bounds = array<i64: 1, 32>}, {transform_indices = @transform_3, window_bounds = array<i64: 16, 32>}, {transform_indices = @transform_4, window_bounds = array<i64: 16, 32>}]} {
    %c0_i32 = arith.constant 0 : i32
    %0 = arith.cmpi eq, %arg2, %c0_i32 : i32
    %1 = arith.extui %0 : i1 to i32
    %c0_i32_0 = arith.constant 0 : i32
    %2 = arith.cmpi ne, %1, %c0_i32_0 : i32
    scf.if %2 {
      %cst_10 = arith.constant 0.000000e+00 : f32
      %12 = vector.broadcast %cst_10 : f32 to vector<16x32xf32>
      %c0_11 = arith.constant 0 : index
      %c0_12 = arith.constant 0 : index
      %13 = vector.load %arg8[%c0_11, %c0_12] : memref<16x32xf32, #tpu.memory_space<vmem>>, vector<16x32xf32>
      tpu.vector_store %arg8[%c0_11, %c0_12], %12 {strides = array<i32>} : memref<16x32xf32, #tpu.memory_space<vmem>>, vector<16x32xf32>,
    } else {
    }
    %c0 = arith.constant 0 : index
    %c0_1 = arith.constant 0 : index
    %3 = vector.load %arg3[%c0, %c0_1] : memref<16x128xf32, #tpu.memory_space<vmem>>, vector<16x128xf32>
    %c0_2 = arith.constant 0 : index
    %c0_3 = arith.constant 0 : index
    %4 = vector.load %arg8[%c0_2, %c0_3] : memref<16x32xf32, #tpu.memory_space<vmem>>, vector<16x32xf32>
    %c0_4 = arith.constant 0 : index
    %c0_5 = arith.constant 0 : index
    %5 = vector.load %arg4[%c0_4, %c0_5] : memref<128x32xf32, #tpu.memory_space<vmem>>, vector<128x32xf32>
    %cst = arith.constant dense<0.000000e+00> : vector<16x32xf32>
    %6 = tpu.matmul %3, %5, %cst {dimension_numbers = #tpu.dot_dimension_numbers<[1], [0], [0], [1], [0, 0, 1, 1], [], []>} : vector<16x128xf32>, vector<128x32xf32>, vector<16x32xf32> -> vector<16x32xf32>
    %7 = arith.addf %4, %6 : vector<16x32xf32>
    %c0_6 = arith.constant 0 : index
    %c0_7 = arith.constant 0 : index
    %8 = vector.load %arg8[%c0_6, %c0_7] : memref<16x32xf32, #tpu.memory_space<vmem>>, vector<16x32xf32>
    tpu.vector_store %arg8[%c0_6, %c0_7], %7 {strides = array<i32>} : memref<16x32xf32, #tpu.memory_space<vmem>>, vector<16x32xf32>,
    %c0_i32_8 = arith.constant 0 : i32
    %9 = arith.cmpi eq, %arg2, %c0_i32_8 : i32
    %10 = arith.extui %9 : i1 to i32
    %c0_i32_9 = arith.constant 0 : i32
    %11 = arith.cmpi ne, %10, %c0_i32_9 : i32
    scf.if %11 {
      %c0_10 = arith.constant 0 : index
      %c0_11 = arith.constant 0 : index
      %12 = vector.load %arg8[%c0_10, %c0_11] : memref<16x32xf32, #tpu.memory_space<vmem>>, vector<16x32xf32>
      %c0_12 = arith.constant 0 : index
      %c0_13 = arith.constant 0 : index
      %13 = vector.load %arg5[%c0_12, %c0_13] : memref<1x32xf32, #tpu.memory_space<vmem>>, vector<1x32xf32>
      %14 = vector.broadcast %13 : vector<1x32xf32> to vector<16x32xf32>
      %15 = arith.addf %12, %14 : vector<16x32xf32>
      %c0_14 = arith.constant 0 : index
      %c0_15 = arith.constant 0 : index
      %16 = vector.load %arg6[%c0_14, %c0_15] : memref<16x32xf32, #tpu.memory_space<vmem>>, vector<16x32xf32>
      %17 = arith.addf %15, %16 : vector<16x32xf32>
      %c0_16 = arith.constant 0 : index
      %c0_17 = arith.constant 0 : index
      %18 = vector.load %arg7[%c0_16, %c0_17] : memref<16x32xf32, #tpu.memory_space<vmem>>, vector<16x32xf32>
      tpu.vector_store %arg7[%c0_16, %c0_17], %17 {strides = array<i32>} : memref<16x32xf32, #tpu.memory_space<vmem>>, vector<16x32xf32>,
    } else {
    }
    return
  }
  func.func @transform_0(%arg0: i32, %arg1: i32, %arg2: i32) -> (i32, i32) {
    %c0_i32 = arith.constant 0 : i32
    return %arg0, %arg2 : i32, i32
  }
  func.func @transform_1(%arg0: i32, %arg1: i32, %arg2: i32) -> (i32, i32) {
    %c0_i32 = arith.constant 0 : i32
    return %arg2, %arg1 : i32, i32
  }
  func.func @transform_2(%arg0: i32, %arg1: i32, %arg2: i32) -> (i32, i32) {
    %c0_i32 = arith.constant 0 : i32
    %c0_i32_0 = arith.constant 0 : i32
    return %c0_i32, %arg1 : i32, i32
  }
  func.func @transform_3(%arg0: i32, %arg1: i32, %arg2: i32) -> (i32, i32) {
    %c0_i32 = arith.constant 0 : i32
    return %arg0, %arg1 : i32, i32
  }
  func.func @transform_4(%arg0: i32, %arg1: i32, %arg2: i32) -> (i32, i32) {
    %c0_i32 = arith.constant 0 : i32
    return %arg0, %arg1 : i32, i32
  }
}

</mosaic_0001>

<llo_original>
// kernel: _lambda_.5
$region0: #{_lambda_.5}
  #allocation0 [shape = 'u32[]', space=smem, size = 0x4, offset = 0x4, fixed_abs, tag = 'smem constant byte address 0x4 - core index']
  #allocation1 [shape = 'u32[144,128]{1,0:T(1,128)}', space=vmem, size = 0x12000, scoped, tag = 'internal scratch']
  #allocation2 [shape = 'f32[16,96]{1,0:T(8,128)}', space=vmem, size = 0x2000, scoped, tag = 'scratch operand']
  %s0 = inlined_call_operand.vmem [shape: f32[16,32], index: 0, kind: input, shape index: {}]
  %s1 = inlined_call_operand.vmem [shape: f32[1,32], index: 1, kind: input, shape index: {}]
  %s2 = inlined_call_operand.vmem [shape: f32[1,32], index: 2, kind: input, shape index: {}]
  %s3 = inlined_call_operand.vmem [shape: f32[32,96], index: 3, kind: input, shape index: {}]
  %s4 = inlined_call_operand.vmem [shape: f32[1,96], index: 4, kind: input, shape index: {}]
  %s5 = inlined_call_operand.vmem [shape: f32[16,96], index: 5, kind: output, shape index: {}]
  %s6 = sld [smem:[#allocation0]]
  $region38: #{_lambda_.5} parent=0
    _
  %s8 = ssub.s32 1, %s6
  %s9 = scalar_select 0, %s8, %s6
  // Predicated region
  $region2: #{_lambda_.5} parent=0 // pred_check
    _
  $region3: #{_lambda_.5} parent=0 // pred_check_branch
    %11 = sbr.rel (0) target = $region5
  $region4: #{_lambda_.5} parent=0 // pred_region
    _
  $region5: #{_lambda_.5} parent=0 // pred_fallthru
    _
  // Predicated region
  $region6: #{_lambda_.5} parent=0 // pred_check
    _
  $region7: #{_lambda_.5} parent=0 // pred_check_branch
    %13 = sbr.rel (0) target = $region9
  $region8: #{_lambda_.5} parent=0 // pred_region
    _
  $region9: #{_lambda_.5} parent=0 // pred_fallthru
    _
  // Predicated region
  $region10: #{_lambda_.5} parent=0 // pred_check
    _
  $region11: #{_lambda_.5} parent=0 // pred_check_branch
    %15 = sbr.rel (0) target = $region13
  $region12: #{_lambda_.5} parent=0 // pred_region
    _
  $region13: #{_lambda_.5} parent=0 // pred_fallthru
    _
  // Predicated region
  $region14: #{_lambda_.5} parent=0 // pred_check
    _
  $region15: #{_lambda_.5} parent=0 // pred_check_branch
    %17 = sbr.rel (0) target = $region17
  $region16: #{_lambda_.5} parent=0 // pred_region
    _
  $region17: #{_lambda_.5} parent=0 // pred_fallthru
    _
  // Predicated region
  $region18: #{_lambda_.5} parent=0 // pred_check
    _
  $region19: #{_lambda_.5} parent=0 // pred_check_branch
    %19 = sbr.rel (0) target = $region21
  $region20: #{_lambda_.5} parent=0 // pred_region
    _
  $region21: #{_lambda_.5} parent=0 // pred_fallthru
    _
  %p20 = scmp.eq.s32.totalorder 0, 0
  // Predicated region
  $region22: #{_lambda_.5} parent=0 // pred_check
    %p21 = pneg %p20
  $region23: #{_lambda_.5} parent=0 // pred_check_branch
    %23 = sbr.rel (%p21) target = $region25
  $region24: #{_lambda_.5} parent=0 // pred_region
    %vm24 = vcmask 785408
    %25 = vst.msk [vmem:[#allocation2] sm:$0xff] %vm24, 0.0
    %26 = vst.msk [vmem:[#allocation2 + $0x8] sm:$0xff] %vm24, 0.0
  $region25: #{_lambda_.5} parent=0 // pred_fallthru
    _
  %v27 = vld [vmem:[%s0] sm:$0xff]
  %v28 = vld [vmem:[%s0 + $0x8] sm:$0xff]
  %vm29 = vcmask 261120
  %v30 = vsel %vm29, %v27, 0.0
  %31 = vadd.xlane.f32.xlu0 %v30
  %v32 = vpop.xlane.xlu0 %31
  %v33 = vsel %vm29, %v28, 0.0
  %34 = vadd.xlane.f32.xlu0 %v33
  %v35 = vpop.xlane.xlu0 %34
  %v36 = vrcp.pop 32.0
  %v37 = vmul.f32 %v32, %v36
  %v38 = vmul.f32 %v35, %v36
  %v39 = vsub.f32 %v27, %v37
  %v40 = vsub.f32 %v28, %v38
  %v41 = vmul.f32 %v39, %v39
  %v42 = vmul.f32 %v40, %v40
  %v43 = vsel %vm29, %v41, 0.0
  %44 = vadd.xlane.f32.xlu0 %v43
  %v45 = vpop.xlane.xlu0 %44
  %v46 = vsel %vm29, %v42, 0.0
  %47 = vadd.xlane.f32.xlu0 %v46
  %v48 = vpop.xlane.xlu0 %47
  %v49 = vmul.f32 %v45, %v36
  %v50 = vmul.f32 %v48, %v36
  %v51 = vadd.f32 %v49, 1e-05
  %v52 = vadd.f32 %v50, 1e-05
  %v53 = vrsqrt.pop %v51
  %v54 = vrsqrt.pop %v52
  %v55 = vmul.f32 %v39, %v53
  %v56 = vmul.f32 %v40, %v54
  %v57 = vld [vmem:[%s1] sm:$0x1]
  %v59 = vlaneseq
  %v60 = vshrl.u32 %v59, 7
  %v61 = vsub.s32 0, %v60
  %v62 = vrot.slane %v57, %v61
  %v64 = vmul.f32 %v55, %v62
  %v65 = vmul.f32 %v56, %v62
  %v66 = vld [vmem:[%s2] sm:$0x1]
  %v68 = vlaneseq
  %v69 = vshrl.u32 %v68, 7
  %v70 = vsub.s32 0, %v69
  %v71 = vrot.slane %v66, %v70
  %v73 = vadd.f32 %v64, %v71
  %v74 = vadd.f32 %v65, %v71
  %v75 = vld [vmem:[#allocation2] sm:$0xff]
  %v76 = vld [vmem:[#allocation2 + $0x8] sm:$0xff]
  %v77 = vld [vmem:[%s3] sm:$0xff]
  %v78 = vld [vmem:[%s3 + $0x8] sm:$0xff]
  %v79 = vld [vmem:[%s3 + $0x10] sm:$0xff]
  %v80 = vld [vmem:[%s3 + $0x18] sm:$0xff]
  %v82 = vsel %vm29, %v73, 0
  %v85 = vsel %vm29, %v74, 0
  %87 = vmatprep.subr.mxu0 0.0
  %88 = vmatpush1.msra.mxu0 %v77
  %89 = vmatprep.subr.mxu0 0.0
  %90 = vmatpush1.msra.mxu0 %v78
  %91 = vmatprep.subr.mxu0 0.0
  %92 = vmatpush1.msra.mxu0 %v79
  %93 = vmatprep.subr.mxu0 0.0
  %94 = vmatpush1.msra.mxu0 %v80
  %95 = vmatprep.subr.mxu0 0.0
  %96 = vmatpush1.msra.mxu0 0.0
  %97 = vmatprep.subr.mxu0 0.0
  %98 = vmatpush1.msra.mxu0 0.0
  %99 = vmatprep.subr.mxu0 0.0
  %100 = vmatpush1.msra.mxu0 0.0
  %101 = vmatprep.subr.mxu0 0.0
  %102 = vmatpush1.msra.mxu0 0.0
  %103 = vmatprep.subr.mxu0 0.0
  %104 = vmatpush1.msra.mxu0 0.0
  %105 = vmatprep.subr.mxu0 0.0
  %106 = vmatpush1.msra.mxu0 0.0
  %107 = vmatprep.subr.mxu0 0.0
  %108 = vmatpush1.msra.mxu0 0.0
  %109 = vmatprep.subr.mxu0 0.0
  %110 = vmatpush1.msra.mxu0 0.0
  %111 = vmatprep.subr.mxu0 0.0
  %112 = vmatpush1.msra.mxu0 0.0
  %113 = vmatprep.subr.mxu0 0.0
  %114 = vmatpush1.msra.mxu0 0.0
  %115 = vmatprep.subr.mxu0 0.0
  %116 = vmatpush1.msra.mxu0 0.0
  %117 = vmatprep.subr.mxu0 0.0
  %118 = vmatpush1.msra.mxu0 0.0
  %119 = vmatprep.subr.mxu0 0.0
  %120 = vmatpush1.msra.mxu0 0.0
  %121 = vmatprep.subr.mxu0 0.0
  %122 = vmatpush1.msra.mxu0 0.0
  %123 = vmatprep.subr.mxu0 0.0
  %124 = vmatpush1.msra.mxu0 0.0
  %125 = vmatprep.subr.mxu0 0.0
  %126 = vmatpush1.msra.mxu0 0.0
  %127 = vmatprep.subr.mxu0 0.0
  %128 = vmatpush1.msra.mxu0 0.0
  %129 = vmatprep.subr.mxu0 0.0
  %130 = vmatpush1.msra.mxu0 0.0
  %131 = vmatprep.subr.mxu0 0.0
  %132 = vmatpush1.msra.mxu0 0.0
  %133 = vmatprep.subr.mxu0 0.0
  %134 = vmatpush1.msra.mxu0 0.0
  %135 = vmatprep.subr.mxu0 0.0
  %136 = vmatpush1.msra.mxu0 0.0
  %137 = vmatprep.subr.mxu0 0.0
  %138 = vmatpush1.msra.mxu0 0.0
  %139 = vmatprep.subr.mxu0 0.0
  %140 = vmatpush1.msra.mxu0 0.0
  %141 = vmatprep.subr.mxu0 0.0
  %142 = vmatpush1.msra.mxu0 0.0
  %143 = vmatprep.subr.mxu0 0.0
  %144 = vmatpush1.msra.mxu0 0.0
  %145 = vmatprep.subr.mxu0 0.0
  %146 = vmatpush1.msra.mxu0 0.0
  %147 = vmatprep.subr.mxu0 0.0
  %148 = vmatpush1.msra.mxu0 0.0
  %149 = vmatprep.subr.mxu0 0.0
  %150 = vmatpush1.msra.mxu0 0.0
  %151 = vmatprep.mubr.f32.mxu0 0.0
  %152 = vmatmul.mubr.f32.gmra.mrb[0].mxu0 %v82
  %v153 = vpop.f32.mrb[0].mxu0
  %v154 = vadd.f32 0.0, %v153
  %v155 = vpop.f32.mrb[0].mxu0
  %156 = vmatprep.mubr.f32.mxu0 0.0
  %157 = vmatmul.mubr.f32.gmra.mrb[0].mxu0 %v85
  %v158 = vpop.f32.mrb[0].mxu0
  %v159 = vadd.f32 0.0, %v158
  %v160 = vpop.f32.mrb[0].mxu0
  %161 = vdwg.mxu0
  %v162 = vadd.f32 %v75, %v154
  %v163 = vadd.f32 %v76, %v159
  %vm164 = vcmask 785408
  %165 = vst.msk [vmem:[#allocation2] sm:$0xff] %vm164, %v162
  %166 = vst.msk [vmem:[#allocation2 + $0x8] sm:$0xff] %vm164, %v163
  // Predicated region
  $region26: #{_lambda_.5} parent=0 // pred_check
    %p167 = pneg %p20
  $region27: #{_lambda_.5} parent=0 // pred_check_branch
    %169 = sbr.rel (%p167) target = $region29
  $region28: #{_lambda_.5} parent=0 // pred_region
    %v170 = vld [vmem:[#allocation2] sm:$0xff]
    %v171 = vld [vmem:[#allocation2 + $0x8] sm:$0xff]
    %v172 = vld [vmem:[%s4] sm:$0x1]
    %v174 = vlaneseq
    %v175 = vshrl.u32 %v174, 7
    %v176 = vsub.s32 0, %v175
    %v177 = vrot.slane %v172, %v176
    %v179 = vadd.f32 %v170, %v177
    %v180 = vadd.f32 %v171, %v177
    %181 = vst.msk [vmem:[%s5] sm:$0xff] %vm164, %v179
    %182 = vst.msk [vmem:[%s5 + $0x8] sm:$0xff] %vm164, %v180
  $region29: #{_lambda_.5} parent=0 // pred_fallthru
    _
  // Predicated region
  $region30: #{_lambda_.5} parent=0 // pred_check
    _
  $region31: #{_lambda_.5} parent=0 // pred_check_branch
    %184 = sbr.rel (0) target = $region33
  $region32: #{_lambda_.5} parent=0 // pred_region
    _
  $region33: #{_lambda_.5} parent=0 // pred_fallthru
    _
  // Predicated region
  $region34: #{_lambda_.5} parent=0 // pred_check
    _
  $region35: #{_lambda_.5} parent=0 // pred_check_branch
    %186 = sbr.rel (0) target = $region37
  $region36: #{_lambda_.5} parent=0 // pred_region
    _
  $region37: #{_lambda_.5} parent=0 // pred_fallthru
    _

// kernel: _lambda_.6
$region0: #{_lambda_.6}
  #allocation0 [shape = 'u32[]', space=smem, size = 0x4, offset = 0x4, fixed_abs, tag = 'smem constant byte address 0x4 - core index']
  #allocation1 [shape = 'u32[144,128]{1,0:T(1,128)}', space=vmem, size = 0x12000, scoped, tag = 'internal scratch']
  %s0 = inlined_call_operand.vmem [shape: f32[2,8,96], index: 0, kind: input, shape index: {}]
  %s1 = inlined_call_operand.vmem [shape: f32[2,8,32], index: 1, kind: output, shape index: {}]
  %s2 = sld [smem:[#allocation0]]
  $region37: #{_lambda_.6} parent=0
    _
  %s4 = ssub.s32 1, %s2
  %s5 = scalar_select 0, %s4, %s2
  loop: start=0, step=1, limit=4
  $region2: #{_lambda_.6} parent=0 // loop_pre_header
    _
  $region3: #{_lambda_.6} parent=0 // loop_header
    %s7 = sphi 0, %s11
    %p8 = scmp.ge.s32.totalorder %s7, 4
    %s17 = sphi 0, %s19
    %s20 = sphi 0, %s17
    %s21 = sphi 0, %s20
    %s37 = sphi 0, %s21
    %s43 = sphi 0, %s45
    %s46 = sphi 0, %s43
    %s47 = sphi 0, %s46
    %s63 = sphi 0, %s47
  $region4: #{_lambda_.6} parent=0 // loop_header_branch
    %10 = sbr.rel (%p8) target = $region8
  $region5: #{_lambda_.6} parent=0 // loop_body
    %s12 = ssub.s32 %s7, 1
    %s13 = ssub.s32 %s7, 2
    %s14 = sadd.s32 %s7, 1
    %s15 = ssub.s32 %s7, %s14
    %p16 = scmp.eq.s32.totalorder %s15, 0
    %s18 = sadd.s32 %s17, 1
    %s19 = scalar_select %p16, %s17, %s18
    %p22 = pneg %p16
    %p23 = scmp.eq.s32.totalorder %s7, 1
    %p24 = por %p22, %p23
    %p25 = scmp.ne.s32.totalorder %s17, %s20
    %p26 = scmp.eq.s32.totalorder %s7, 0
    %p27 = por %p25, %p26
    %p28 = scmp.ne.s32.totalorder %s17, %s20
    %p29 = scmp.eq.s32.totalorder %s12, 1
    %p30 = por %p28, %p29
    %p31 = scmp.ne.s32.totalorder %s20, %s21
    %p32 = scmp.eq.s32.totalorder %s12, 0
    %p33 = por %p31, %p32
    %p34 = scmp.ne.s32.totalorder %s20, %s21
    %p35 = scmp.eq.s32.totalorder %s13, 1
    %p36 = por %p34, %p35
    %p38 = scmp.ne.s32.totalorder %s21, %s37
    %p39 = scmp.eq.s32.totalorder %s13, 0
    %p40 = por %p38, %p39
    %s41 = ssub.s32 %s7, %s14
    %p42 = scmp.eq.s32.totalorder %s41, 0
    %s44 = sadd.s32 %s43, 1
    %s45 = scalar_select %p42, %s43, %s44
    %p48 = pneg %p42
    %p49 = scmp.eq.s32.totalorder %s7, 1
    %p50 = por %p48, %p49
    %p51 = scmp.ne.s32.totalorder %s43, %s46
    %p52 = scmp.eq.s32.totalorder %s7, 0
    %p53 = por %p51, %p52
    %p54 = scmp.ne.s32.totalorder %s43, %s46
    %p55 = scmp.eq.s32.totalorder %s12, 1
    %p56 = por %p54, %p55
    %p57 = scmp.ne.s32.totalorder %s46, %s47
    %p58 = scmp.eq.s32.totalorder %s12, 0
    %p59 = por %p57, %p58
    %p60 = scmp.ne.s32.totalorder %s46, %s47
    %p61 = scmp.eq.s32.totalorder %s13, 1
    %p62 = por %p60, %p61
    %p64 = scmp.ne.s32.totalorder %s47, %s63
    %p65 = scmp.eq.s32.totalorder %s13, 0
    %p66 = por %p64, %p65
    %p67 = scmp.le.s32.totalorder 1, %s7
    %p68 = scmp.lt.s32.totalorder %s7, 3
    %p69 = pnand %p67, %p68
    %p70 = pneg %p69
    // Predicated region
    $region9: #{_lambda_.6} parent=5 // pred_check
      _
    $region10: #{_lambda_.6} parent=5 // pred_check_branch
      %72 = sbr.rel (%p69) target = $region12
    $region11: #{_lambda_.6} parent=5 // pred_region
      %s73 = ssub.s32 %s7, 1
    $region12: #{_lambda_.6} parent=5 // pred_fallthru
      _
    %p74 = scmp.lt.s32.totalorder %s7, 2
    // Predicated region
    $region13: #{_lambda_.6} parent=5 // pred_check
      %p75 = pneg %p74
    $region14: #{_lambda_.6} parent=5 // pred_check_branch
      %77 = sbr.rel (%p75) target = $region16
    $region15: #{_lambda_.6} parent=5 // pred_region
      // Predicated region
      $region17: #{_lambda_.6} parent=15 // pred_check
        %p78 = pneg %p27
      $region18: #{_lambda_.6} parent=15 // pred_check_branch
        %80 = sbr.rel (%p78) target = $region20
      $region19: #{_lambda_.6} parent=15 // pred_region
        %p81 = scmp.lt.s32.totalorder %s7, 1
        %s82 = scalar_select %p81, %s7, 1
        %s83 = smul.addr %s82, 8
        %s84 = scalar_lea.vmem %s0, %s83
      $region20: #{_lambda_.6} parent=15 // pred_fallthru
        _
    $region16: #{_lambda_.6} parent=5 // pred_fallthru
      _
    %p85 = scmp.le.s32.totalorder 1, %s7
    %p86 = scmp.lt.s32.totalorder %s7, 3
    %p87 = pnand %p85, %p86
    %p88 = pneg %p87
    // Predicated region
    $region21: #{_lambda_.6} parent=5 // pred_check
      _
    $region22: #{_lambda_.6} parent=5 // pred_check_branch
      %90 = sbr.rel (%p87) target = $region24
    $region23: #{_lambda_.6} parent=5 // pred_region
      %s91 = ssub.s32 %s7, 1
      %p92 = scmp.lt.s32.totalorder %s12, 1
      %s93 = scalar_select %p92, %s12, 1
      %s94 = smul.addr %s93, 8
      %s95 = scalar_lea.vmem %s0, %s94
      %p96 = pneg %p33
      %p97 = pneg %p30
      %p98 = pneg %p59
      %p99 = pneg %p56
      %p100 = scmp.lt.s32.totalorder %s12, 1
      %s101 = scalar_select %p100, %s12, 1
      %s102 = smul.addr %s101, 8
      %s103 = scalar_lea.vmem %s1, %s102
      %p104 = scmp.lt.s32.totalorder %s12, 1
      %s105 = scalar_select %p104, %s12, 1
      %s106 = smul.addr %s105, 8
      %s107 = scalar_lea.vmem %s0, %s106
      %p108 = scmp.lt.s32.totalorder %s12, 1
      %s109 = scalar_select %p108, %s12, 1
      %s110 = smul.addr %s109, 8
      %s111 = scalar_lea.vmem %s1, %s110
      %v112 = vld [vmem:[%s107] sm:$0xff]
      %v113 = vmul.f32 %v112, 0.35355338
      %115 = vrot.lane.b32.xlu0 %v112, 96
      %v116 = vpop.permute.xlu0 %115
      %vm117 = vcmask 64512
      %v119 = vsel %vm117, %v113, 0
      %v121 = vsel %vm117, %v116, 0
      %123 = vmatprep.subr.mxu0 0.0
      %124 = vmatpush1.xpose.msra.mxu0 %v121
      %125 = vmatprep.subr.mxu0 0.0
      %126 = vmatpush1.xpose.msra.mxu0 0.0
      %127 = vmatprep.subr.mxu0 0.0
      %128 = vmatpush1.xpose.msra.mxu0 0.0
      %129 = vmatprep.subr.mxu0 0.0
      %130 = vmatpush1.xpose.msra.mxu0 0.0
      %131 = vmatprep.subr.mxu0 0.0
      %132 = vmatpush1.xpose.msra.mxu0 0.0
      %133 = vmatprep.subr.mxu0 0.0
      %134 = vmatpush1.xpose.msra.mxu0 0.0
      %135 = vmatprep.subr.mxu0 0.0
      %136 = vmatpush1.xpose.msra.mxu0 0.0
      %137 = vmatprep.subr.mxu0 0.0
      %138 = vmatpush1.xpose.msra.mxu0 0.0
      %139 = vmatprep.subr.mxu0 0.0
      %140 = vmatpush1.xpose.msra.mxu0 0.0
      %141 = vmatprep.subr.mxu0 0.0
      %142 = vmatpush1.xpose.msra.mxu0 0.0
      %143 = vmatprep.subr.mxu0 0.0
      %144 = vmatpush1.xpose.msra.mxu0 0.0
      %145 = vmatprep.subr.mxu0 0.0
      %146 = vmatpush1.xpose.msra.mxu0 0.0
      %147 = vmatprep.subr.mxu0 0.0
      %148 = vmatpush1.xpose.msra.mxu0 0.0
      %149 = vmatprep.subr.mxu0 0.0
      %150 = vmatpush1.xpose.msra.mxu0 0.0
      %151 = vmatprep.subr.mxu0 0.0
      %152 = vmatpush1.xpose.msra.mxu0 0.0
      %153 = vmatprep.subr.mxu0 0.0
      %154 = vmatpush1.xpose.msra.mxu0 0.0
      %155 = vmatprep.subr.mxu0 0.0
      %156 = vmatpush1.xpose.msra.mxu0 0.0
      %157 = vmatprep.subr.mxu0 0.0
      %158 = vmatpush1.xpose.msra.mxu0 0.0
      %159 = vmatprep.subr.mxu0 0.0
      %160 = vmatpush1.xpose.msra.mxu0 0.0
      %161 = vmatprep.subr.mxu0 0.0
      %162 = vmatpush1.xpose.msra.mxu0 0.0
      %163 = vmatprep.subr.mxu0 0.0
      %164 = vmatpush1.xpose.msra.mxu0 0.0
      %165 = vmatprep.subr.mxu0 0.0
      %166 = vmatpush1.xpose.msra.mxu0 0.0
      %167 = vmatprep.subr.mxu0 0.0
      %168 = vmatpush1.xpose.msra.mxu0 0.0
      %169 = vmatprep.subr.mxu0 0.0
      %170 = vmatpush1.xpose.msra.mxu0 0.0
      %171 = vmatprep.subr.mxu0 0.0
      %172 = vmatpush1.xpose.msra.mxu0 0.0
      %173 = vmatprep.subr.mxu0 0.0
      %174 = vmatpush1.xpose.msra.mxu0 0.0
      %175 = vmatprep.subr.mxu0 0.0
      %176 = vmatpush1.xpose.msra.mxu0 0.0
      %177 = vmatprep.subr.mxu0 0.0
      %178 = vmatpush1.xpose.msra.mxu0 0.0
      %179 = vmatprep.subr.mxu0 0.0
      %180 = vmatpush1.xpose.msra.mxu0 0.0
      %181 = vmatprep.subr.mxu0 0.0
      %182 = vmatpush1.xpose.msra.mxu0 0.0
      %183 = vmatprep.subr.mxu0 0.0
      %184 = vmatpush1.xpose.msra.mxu0 0.0
      %185 = vmatprep.subr.mxu0 0.0
      %186 = vmatpush1.xpose.msra.mxu0 0.0
      %187 = vmatprep.mubr.f32.mxu0 0.0
      %188 = vmatmul.mubr.f32.gmra.mrb[0].mxu0 %v119
      %v189 = vpop.f32.mrb[0].mxu0
      %v190 = vadd.f32 0.0, %v189
      %v191 = vpop.f32.mrb[0].mxu0
      %192 = vdwg.mxu0
      %v193 = vsel %vm117, %v190, -inf
      %194 = vmax.xlane.f32.xlu0 %v193
      %v195 = vpop.xlane.xlu0 %194
      %v196 = vsub.f32 %v190, %v195
      %v197 = vmul.f32 %v196, 1.442695
      %v198 = vpow.pop %v197
      %v199 = vsel %vm117, %v198, 0.0
      %200 = vadd.xlane.f32.xlu0 %v199
      %v201 = vpop.xlane.xlu0 %200
      %202 = vrot.lane.b32.xlu0 %v112, 64
      %v203 = vpop.permute.xlu0 %202
      %v206 = vsel %vm117, %v198, 0
      %208 = vmatprep.subr.mxu0 0.0
      %209 = vmatpush1.msra.mxu0 %v203
      %210 = vmatprep.subr.mxu0 0.0
      %211 = vmatpush1.msra.mxu0 0.0
      %212 = vmatprep.subr.mxu0 0.0
      %213 = vmatpush1.msra.mxu0 0.0
      %214 = vmatprep.subr.mxu0 0.0
      %215 = vmatpush1.msra.mxu0 0.0
      %216 = vmatprep.subr.mxu0 0.0
      %217 = vmatpush1.msra.mxu0 0.0
      %218 = vmatprep.subr.mxu0 0.0
      %219 = vmatpush1.msra.mxu0 0.0
      %220 = vmatprep.subr.mxu0 0.0
      %221 = vmatpush1.msra.mxu0 0.0
      %222 = vmatprep.subr.mxu0 0.0
      %223 = vmatpush1.msra.mxu0 0.0
      %224 = vmatprep.subr.mxu0 0.0
      %225 = vmatpush1.msra.mxu0 0.0
      %226 = vmatprep.subr.mxu0 0.0
      %227 = vmatpush1.msra.mxu0 0.0
      %228 = vmatprep.subr.mxu0 0.0
      %229 = vmatpush1.msra.mxu0 0.0
      %230 = vmatprep.subr.mxu0 0.0
      %231 = vmatpush1.msra.mxu0 0.0
      %232 = vmatprep.subr.mxu0 0.0
      %233 = vmatpush1.msra.mxu0 0.0
      %234 = vmatprep.subr.mxu0 0.0
      %235 = vmatpush1.msra.mxu0 0.0
      %236 = vmatprep.subr.mxu0 0.0
      %237 = vmatpush1.msra.mxu0 0.0
      %238 = vmatprep.subr.mxu0 0.0
      %239 = vmatpush1.msra.mxu0 0.0
      %240 = vmatprep.subr.mxu0 0.0
      %241 = vmatpush1.msra.mxu0 0.0
      %242 = vmatprep.subr.mxu0 0.0
      %243 = vmatpush1.msra.mxu0 0.0
      %244 = vmatprep.subr.mxu0 0.0
      %245 = vmatpush1.msra.mxu0 0.0
      %246 = vmatprep.subr.mxu0 0.0
      %247 = vmatpush1.msra.mxu0 0.0
      %248 = vmatprep.subr.mxu0 0.0
      %249 = vmatpush1.msra.mxu0 0.0
      %250 = vmatprep.subr.mxu0 0.0
      %251 = vmatpush1.msra.mxu0 0.0
      %252 = vmatprep.subr.mxu0 0.0
      %253 = vmatpush1.msra.mxu0 0.0
      %254 = vmatprep.subr.mxu0 0.0
      %255 = vmatpush1.msra.mxu0 0.0
      %256 = vmatprep.subr.mxu0 0.0
      %257 = vmatpush1.msra.mxu0 0.0
      %258 = vmatprep.subr.mxu0 0.0
      %259 = vmatpush1.msra.mxu0 0.0
      %260 = vmatprep.subr.mxu0 0.0
      %261 = vmatpush1.msra.mxu0 0.0
      %262 = vmatprep.subr.mxu0 0.0
      %263 = vmatpush1.msra.mxu0 0.0
      %264 = vmatprep.subr.mxu0 0.0
      %265 = vmatpush1.msra.mxu0 0.0
      %266 = vmatprep.subr.mxu0 0.0
      %267 = vmatpush1.msra.mxu0 0.0
      %268 = vmatprep.subr.mxu0 0.0
      %269 = vmatpush1.msra.mxu0 0.0
      %270 = vmatprep.subr.mxu0 0.0
      %271 = vmatpush1.msra.mxu0 0.0
      %272 = vmatprep.mubr.f32.mxu0 0.0
      %273 = vmatmul.mubr.f32.gmra.mrb[0].mxu0 %v206
      %v274 = vpop.f32.mrb[0].mxu0
      %v275 = vadd.f32 0.0, %v274
      %v276 = vpop.f32.mrb[0].mxu0
      %277 = vdwg.mxu0
      %v278 = vrcp.pop %v201
      %v279 = vmul.f32 %v275, %v278
      %280 = vrot.lane.b32.xlu0 %v113, 120
      %v281 = vpop.permute.xlu0 %280
      %282 = vrot.lane.b32.xlu0 %v112, 88
      %v283 = vpop.permute.xlu0 %282
      %v284 = vsel %vm117, %v281, 0
      %v286 = vsel %vm117, %v283, 0
      %288 = vmatprep.subr.mxu0 0.0
      %289 = vmatpush1.xpose.msra.mxu0 %v286
      %290 = vmatprep.subr.mxu0 0.0
      %291 = vmatpush1.xpose.msra.mxu0 0.0
      %292 = vmatprep.subr.mxu0 0.0
      %293 = vmatpush1.xpose.msra.mxu0 0.0
      %294 = vmatprep.subr.mxu0 0.0
      %295 = vmatpush1.xpose.msra.mxu0 0.0
      %296 = vmatprep.subr.mxu0 0.0
      %297 = vmatpush1.xpose.msra.mxu0 0.0
      %298 = vmatprep.subr.mxu0 0.0
      %299 = vmatpush1.xpose.msra.mxu0 0.0
      %300 = vmatprep.subr.mxu0 0.0
      %301 = vmatpush1.xpose.msra.mxu0 0.0
      %302 = vmatprep.subr.mxu0 0.0
      %303 = vmatpush1.xpose.msra.mxu0 0.0
      %304 = vmatprep.subr.mxu0 0.0
      %305 = vmatpush1.xpose.msra.mxu0 0.0
      %306 = vmatprep.subr.mxu0 0.0
      %307 = vmatpush1.xpose.msra.mxu0 0.0
      %308 = vmatprep.subr.mxu0 0.0
      %309 = vmatpush1.xpose.msra.mxu0 0.0
      %310 = vmatprep.subr.mxu0 0.0
      %311 = vmatpush1.xpose.msra.mxu0 0.0
      %312 = vmatprep.subr.mxu0 0.0
      %313 = vmatpush1.xpose.msra.mxu0 0.0
      %314 = vmatprep.subr.mxu0 0.0
      %315 = vmatpush1.xpose.msra.mxu0 0.0
      %316 = vmatprep.subr.mxu0 0.0
      %317 = vmatpush1.xpose.msra.mxu0 0.0
      %318 = vmatprep.subr.mxu0 0.0
      %319 = vmatpush1.xpose.msra.mxu0 0.0
      %320 = vmatprep.subr.mxu0 0.0
      %321 = vmatpush1.xpose.msra.mxu0 0.0
      %322 = vmatprep.subr.mxu0 0.0
      %323 = vmatpush1.xpose.msra.mxu0 0.0
      %324 = vmatprep.subr.mxu0 0.0
      %325 = vmatpush1.xpose.msra.mxu0 0.0
      %326 = vmatprep.subr.mxu0 0.0
      %327 = vmatpush1.xpose.msra.mxu0 0.0
      %328 = vmatprep.subr.mxu0 0.0
      %329 = vmatpush1.xpose.msra.mxu0 0.0
      %330 = vmatprep.subr.mxu0 0.0
      %331 = vmatpush1.xpose.msra.mxu0 0.0
      %332 = vmatprep.subr.mxu0 0.0
      %333 = vmatpush1.xpose.msra.mxu0 0.0
      %334 = vmatprep.subr.mxu0 0.0
      %335 = vmatpush1.xpose.msra.mxu0 0.0
      %336 = vmatprep.subr.mxu0 0.0
      %337 = vmatpush1.xpose.msra.mxu0 0.0
      %338 = vmatprep.subr.mxu0 0.0
      %339 = vmatpush1.xpose.msra.mxu0 0.0
      %340 = vmatprep.subr.mxu0 0.0
      %341 = vmatpush1.xpose.msra.mxu0 0.0
      %342 = vmatprep.subr.mxu0 0.0
      %343 = vmatpush1.xpose.msra.mxu0 0.0
      %344 = vmatprep.subr.mxu0 0.0
      %345 = vmatpush1.xpose.msra.mxu0 0.0
      %346 = vmatprep.subr.mxu0 0.0
      %347 = vmatpush1.xpose.msra.mxu0 0.0
      %348 = vmatprep.subr.mxu0 0.0
      %349 = vmatpush1.xpose.msra.mxu0 0.0
      %350 = vmatprep.subr.mxu0 0.0
      %351 = vmatpush1.xpose.msra.mxu0 0.0
      %352 = vmatprep.mubr.f32.mxu0 0.0
      %353 = vmatmul.mubr.f32.gmra.mrb[0].mxu0 %v284
      %v354 = vpop.f32.mrb[0].mxu0
      %v355 = vadd.f32 0.0, %v354
      %v356 = vpop.f32.mrb[0].mxu0
      %357 = vdwg.mxu0
      %v358 = vsel %vm117, %v355, -inf
      %359 = vmax.xlane.f32.xlu0 %v358
      %v360 = vpop.xlane.xlu0 %359
      %v361 = vsub.f32 %v355, %v360
      %v362 = vmul.f32 %v361, 1.442695
      %v363 = vpow.pop %v362
      %v364 = vsel %vm117, %v363, 0.0
      %365 = vadd.xlane.f32.xlu0 %v364
      %v366 = vpop.xlane.xlu0 %365
      %367 = vrot.lane.b32.xlu0 %v112, 56
      %v368 = vpop.permute.xlu0 %367
      %v371 = vsel %vm117, %v363, 0
      %373 = vmatprep.subr.mxu0 0.0
      %374 = vmatpush1.msra.mxu0 %v368
      %375 = vmatprep.subr.mxu0 0.0
      %376 = vmatpush1.msra.mxu0 0.0
      %377 = vmatprep.subr.mxu0 0.0
      %378 = vmatpush1.msra.mxu0 0.0
      %379 = vmatprep.subr.mxu0 0.0
      %380 = vmatpush1.msra.mxu0 0.0
      %381 = vmatprep.subr.mxu0 0.0
      %382 = vmatpush1.msra.mxu0 0.0
      %383 = vmatprep.subr.mxu0 0.0
      %384 = vmatpush1.msra.mxu0 0.0
      %385 = vmatprep.subr.mxu0 0.0
      %386 = vmatpush1.msra.mxu0 0.0
      %387 = vmatprep.subr.mxu0 0.0
      %388 = vmatpush1.msra.mxu0 0.0
      %389 = vmatprep.subr.mxu0 0.0
      %390 = vmatpush1.msra.mxu0 0.0
      %391 = vmatprep.subr.mxu0 0.0
      %392 = vmatpush1.msra.mxu0 0.0
      %393 = vmatprep.subr.mxu0 0.0
      %394 = vmatpush1.msra.mxu0 0.0
      %395 = vmatprep.subr.mxu0 0.0
      %396 = vmatpush1.msra.mxu0 0.0
      %397 = vmatprep.subr.mxu0 0.0
      %398 = vmatpush1.msra.mxu0 0.0
      %399 = vmatprep.subr.mxu0 0.0
      %400 = vmatpush1.msra.mxu0 0.0
      %401 = vmatprep.subr.mxu0 0.0
      %402 = vmatpush1.msra.mxu0 0.0
      %403 = vmatprep.subr.mxu0 0.0
      %404 = vmatpush1.msra.mxu0 0.0
      %405 = vmatprep.subr.mxu0 0.0
      %406 = vmatpush1.msra.mxu0 0.0
      %407 = vmatprep.subr.mxu0 0.0
      %408 = vmatpush1.msra.mxu0 0.0
      %409 = vmatprep.subr.mxu0 0.0
      %410 = vmatpush1.msra.mxu0 0.0
      %411 = vmatprep.subr.mxu0 0.0
      %412 = vmatpush1.msra.mxu0 0.0
      %413 = vmatprep.subr.mxu0 0.0
      %414 = vmatpush1.msra.mxu0 0.0
      %415 = vmatprep.subr.mxu0 0.0
      %416 = vmatpush1.msra.mxu0 0.0
      %417 = vmatprep.subr.mxu0 0.0
      %418 = vmatpush1.msra.mxu0 0.0
      %419 = vmatprep.subr.mxu0 0.0
      %420 = vmatpush1.msra.mxu0 0.0
      %421 = vmatprep.subr.mxu0 0.0
      %422 = vmatpush1.msra.mxu0 0.0
      %423 = vmatprep.subr.mxu0 0.0
      %424 = vmatpush1.msra.mxu0 0.0
      %425 = vmatprep.subr.mxu0 0.0
      %426 = vmatpush1.msra.mxu0 0.0
      %427 = vmatprep.subr.mxu0 0.0
      %428 = vmatpush1.msra.mxu0 0.0
      %429 = vmatprep.subr.mxu0 0.0
      %430 = vmatpush1.msra.mxu0 0.0
      %431 = vmatprep.subr.mxu0 0.0
      %432 = vmatpush1.msra.mxu0 0.0
      %433 = vmatprep.subr.mxu0 0.0
      %434 = vmatpush1.msra.mxu0 0.0
      %435 = vmatprep.subr.mxu0 0.0
      %436 = vmatpush1.msra.mxu0 0.0
      %437 = vmatprep.mubr.f32.mxu0 0.0
      %438 = vmatmul.mubr.f32.gmra.mrb[0].mxu0 %v371
      %v439 = vpop.f32.mrb[0].mxu0
      %v440 = vadd.f32 0.0, %v439
      %v441 = vpop.f32.mrb[0].mxu0
      %442 = vdwg.mxu0
      %v443 = vrcp.pop %v366
      %v444 = vmul.f32 %v440, %v443
      %445 = vrot.lane.b32.xlu0 %v113, 112
      %v446 = vpop.permute.xlu0 %445
      %447 = vrot.lane.b32.xlu0 %v112, 80
      %v448 = vpop.permute.xlu0 %447
      %v449 = vsel %vm117, %v446, 0
      %v451 = vsel %vm117, %v448, 0
      %453 = vmatprep.subr.mxu0 0.0
      %454 = vmatpush1.xpose.msra.mxu0 %v451
      %455 = vmatprep.subr.mxu0 0.0
      %456 = vmatpush1.xpose.msra.mxu0 0.0
      %457 = vmatprep.subr.mxu0 0.0
      %458 = vmatpush1.xpose.msra.mxu0 0.0
      %459 = vmatprep.subr.mxu0 0.0
      %460 = vmatpush1.xpose.msra.mxu0 0.0
      %461 = vmatprep.subr.mxu0 0.0
      %462 = vmatpush1.xpose.msra.mxu0 0.0
      %463 = vmatprep.subr.mxu0 0.0
      %464 = vmatpush1.xpose.msra.mxu0 0.0
      %465 = vmatprep.subr.mxu0 0.0
      %466 = vmatpush1.xpose.msra.mxu0 0.0
      %467 = vmatprep.subr.mxu0 0.0
      %468 = vmatpush1.xpose.msra.mxu0 0.0
      %469 = vmatprep.subr.mxu0 0.0
      %470 = vmatpush1.xpose.msra.mxu0 0.0
      %471 = vmatprep.subr.mxu0 0.0
      %472 = vmatpush1.xpose.msra.mxu0 0.0
      %473 = vmatprep.subr.mxu0 0.0
      %474 = vmatpush1.xpose.msra.mxu0 0.0
      %475 = vmatprep.subr.mxu0 0.0
      %476 = vmatpush1.xpose.msra.mxu0 0.0
      %477 = vmatprep.subr.mxu0 0.0
      %478 = vmatpush1.xpose.msra.mxu0 0.0
      %479 = vmatprep.subr.mxu0 0.0
      %480 = vmatpush1.xpose.msra.mxu0 0.0
      %481 = vmatprep.subr.mxu0 0.0
      %482 = vmatpush1.xpose.msra.mxu0 0.0
      %483 = vmatprep.subr.mxu0 0.0
      %484 = vmatpush1.xpose.msra.mxu0 0.0
      %485 = vmatprep.subr.mxu0 0.0
      %486 = vmatpush1.xpose.msra.mxu0 0.0
      %487 = vmatprep.subr.mxu0 0.0
      %488 = vmatpush1.xpose.msra.mxu0 0.0
      %489 = vmatprep.subr.mxu0 0.0
      %490 = vmatpush1.xpose.msra.mxu0 0.0
      %491 = vmatprep.subr.mxu0 0.0
      %492 = vmatpush1.xpose.msra.mxu0 0.0
      %493 = vmatprep.subr.mxu0 0.0
      %494 = vmatpush1.xpose.msra.mxu0 0.0
      %495 = vmatprep.subr.mxu0 0.0
      %496 = vmatpush1.xpose.msra.mxu0 0.0
      %497 = vmatprep.subr.mxu0 0.0
      %498 = vmatpush1.xpose.msra.mxu0 0.0
      %499 = vmatprep.subr.mxu0 0.0
      %500 = vmatpush1.xpose.msra.mxu0 0.0
      %501 = vmatprep.subr.mxu0 0.0
      %502 = vmatpush1.xpose.msra.mxu0 0.0
      %503 = vmatprep.subr.mxu0 0.0
      %504 = vmatpush1.xpose.msra.mxu0 0.0
      %505 = vmatprep.subr.mxu0 0.0
      %506 = vmatpush1.xpose.msra.mxu0 0.0
      %507 = vmatprep.subr.mxu0 0.0
      %508 = vmatpush1.xpose.msra.mxu0 0.0
      %509 = vmatprep.subr.mxu0 0.0
      %510 = vmatpush1.xpose.msra.mxu0 0.0
      %511 = vmatprep.subr.mxu0 0.0
      %512 = vmatpush1.xpose.msra.mxu0 0.0
      %513 = vmatprep.subr.mxu0 0.0
      %514 = vmatpush1.xpose.msra.mxu0 0.0
      %515 = vmatprep.subr.mxu0 0.0
      %516 = vmatpush1.xpose.msra.mxu0 0.0
      %517 = vmatprep.mubr.f32.mxu0 0.0
      %518 = vmatmul.mubr.f32.gmra.mrb[0].mxu0 %v449
      %v519 = vpop.f32.mrb[0].mxu0
      %v520 = vadd.f32 0.0, %v519
      %v521 = vpop.f32.mrb[0].mxu0
      %522 = vdwg.mxu0
      %v523 = vsel %vm117, %v520, -inf
      %524 = vmax.xlane.f32.xlu0 %v523
      %v525 = vpop.xlane.xlu0 %524
      %v526 = vsub.f32 %v520, %v525
      %v527 = vmul.f32 %v526, 1.442695
      %v528 = vpow.pop %v527
      %v529 = vsel %vm117, %v528, 0.0
      %530 = vadd.xlane.f32.xlu0 %v529
      %v531 = vpop.xlane.xlu0 %530
      %532 = vrot.lane.b32.xlu0 %v112, 48
      %v533 = vpop.permute.xlu0 %532
      %v536 = vsel %vm117, %v528, 0
      %538 = vmatprep.subr.mxu0 0.0
      %539 = vmatpush1.msra.mxu0 %v533
      %540 = vmatprep.subr.mxu0 0.0
      %541 = vmatpush1.msra.mxu0 0.0
      %542 = vmatprep.subr.mxu0 0.0
      %543 = vmatpush1.msra.mxu0 0.0
      %544 = vmatprep.subr.mxu0 0.0
      %545 = vmatpush1.msra.mxu0 0.0
      %546 = vmatprep.subr.mxu0 0.0
      %547 = vmatpush1.msra.mxu0 0.0
      %548 = vmatprep.subr.mxu0 0.0
      %549 = vmatpush1.msra.mxu0 0.0
      %550 = vmatprep.subr.mxu0 0.0
      %551 = vmatpush1.msra.mxu0 0.0
      %552 = vmatprep.subr.mxu0 0.0
      %553 = vmatpush1.msra.mxu0 0.0
      %554 = vmatprep.subr.mxu0 0.0
      %555 = vmatpush1.msra.mxu0 0.0
      %556 = vmatprep.subr.mxu0 0.0
      %557 = vmatpush1.msra.mxu0 0.0
      %558 = vmatprep.subr.mxu0 0.0
      %559 = vmatpush1.msra.mxu0 0.0
      %560 = vmatprep.subr.mxu0 0.0
      %561 = vmatpush1.msra.mxu0 0.0
      %562 = vmatprep.subr.mxu0 0.0
      %563 = vmatpush1.msra.mxu0 0.0
      %564 = vmatprep.subr.mxu0 0.0
      %565 = vmatpush1.msra.mxu0 0.0
      %566 = vmatprep.subr.mxu0 0.0
      %567 = vmatpush1.msra.mxu0 0.0
      %568 = vmatprep.subr.mxu0 0.0
      %569 = vmatpush1.msra.mxu0 0.0
      %570 = vmatprep.subr.mxu0 0.0
      %571 = vmatpush1.msra.mxu0 0.0
      %572 = vmatprep.subr.mxu0 0.0
      %573 = vmatpush1.msra.mxu0 0.0
      %574 = vmatprep.subr.mxu0 0.0
      %575 = vmatpush1.msra.mxu0 0.0
      %576 = vmatprep.subr.mxu0 0.0
      %577 = vmatpush1.msra.mxu0 0.0
      %578 = vmatprep.subr.mxu0 0.0
      %579 = vmatpush1.msra.mxu0 0.0
      %580 = vmatprep.subr.mxu0 0.0
      %581 = vmatpush1.msra.mxu0 0.0
      %582 = vmatprep.subr.mxu0 0.0
      %583 = vmatpush1.msra.mxu0 0.0
      %584 = vmatprep.subr.mxu0 0.0
      %585 = vmatpush1.msra.mxu0 0.0
      %586 = vmatprep.subr.mxu0 0.0
      %587 = vmatpush1.msra.mxu0 0.0
      %588 = vmatprep.subr.mxu0 0.0
      %589 = vmatpush1.msra.mxu0 0.0
      %590 = vmatprep.subr.mxu0 0.0
      %591 = vmatpush1.msra.mxu0 0.0
      %592 = vmatprep.subr.mxu0 0.0
      %593 = vmatpush1.msra.mxu0 0.0
      %594 = vmatprep.subr.mxu0 0.0
      %595 = vmatpush1.msra.mxu0 0.0
      %596 = vmatprep.subr.mxu0 0.0
      %597 = vmatpush1.msra.mxu0 0.0
      %598 = vmatprep.subr.mxu0 0.0
      %599 = vmatpush1.msra.mxu0 0.0
      %600 = vmatprep.subr.mxu0 0.0
      %601 = vmatpush1.msra.mxu0 0.0
      %602 = vmatprep.mubr.f32.mxu0 0.0
      %603 = vmatmul.mubr.f32.gmra.mrb[0].mxu0 %v536
      %v604 = vpop.f32.mrb[0].mxu0
      %v605 = vadd.f32 0.0, %v604
      %v606 = vpop.f32.mrb[0].mxu0
      %607 = vdwg.mxu0
      %v608 = vrcp.pop %v531
      %v609 = vmul.f32 %v605, %v608
      %610 = vrot.lane.b32.xlu0 %v113, 104
      %v611 = vpop.permute.xlu0 %610
      %612 = vrot.lane.b32.xlu0 %v112, 72
      %v613 = vpop.permute.xlu0 %612
      %v614 = vsel %vm117, %v611, 0
      %v616 = vsel %vm117, %v613, 0
      %618 = vmatprep.subr.mxu0 0.0
      %619 = vmatpush1.xpose.msra.mxu0 %v616
      %620 = vmatprep.subr.mxu0 0.0
      %621 = vmatpush1.xpose.msra.mxu0 0.0
      %622 = vmatprep.subr.mxu0 0.0
      %623 = vmatpush1.xpose.msra.mxu0 0.0
      %624 = vmatprep.subr.mxu0 0.0
      %625 = vmatpush1.xpose.msra.mxu0 0.0
      %626 = vmatprep.subr.mxu0 0.0
      %627 = vmatpush1.xpose.msra.mxu0 0.0
      %628 = vmatprep.subr.mxu0 0.0
      %629 = vmatpush1.xpose.msra.mxu0 0.0
      %630 = vmatprep.subr.mxu0 0.0
      %631 = vmatpush1.xpose.msra.mxu0 0.0
      %632 = vmatprep.subr.mxu0 0.0
      %633 = vmatpush1.xpose.msra.mxu0 0.0
      %634 = vmatprep.subr.mxu0 0.0
      %635 = vmatpush1.xpose.msra.mxu0 0.0
      %636 = vmatprep.subr.mxu0 0.0
      %637 = vmatpush1.xpose.msra.mxu0 0.0
      %638 = vmatprep.subr.mxu0 0.0
      %639 = vmatpush1.xpose.msra.mxu0 0.0
      %640 = vmatprep.subr.mxu0 0.0
      %641 = vmatpush1.xpose.msra.mxu0 0.0
      %642 = vmatprep.subr.mxu0 0.0
      %643 = vmatpush1.xpose.msra.mxu0 0.0
      %644 = vmatprep.subr.mxu0 0.0
      %645 = vmatpush1.xpose.msra.mxu0 0.0
      %646 = vmatprep.subr.mxu0 0.0
      %647 = vmatpush1.xpose.msra.mxu0 0.0
      %648 = vmatprep.subr.mxu0 0.0
      %649 = vmatpush1.xpose.msra.mxu0 0.0
      %650 = vmatprep.subr.mxu0 0.0
      %651 = vmatpush1.xpose.msra.mxu0 0.0
      %652 = vmatprep.subr.mxu0 0.0
      %653 = vmatpush1.xpose.msra.mxu0 0.0
      %654 = vmatprep.subr.mxu0 0.0
      %655 = vmatpush1.xpose.msra.mxu0 0.0
      %656 = vmatprep.subr.mxu0 0.0
      %657 = vmatpush1.xpose.msra.mxu0 0.0
      %658 = vmatprep.subr.mxu0 0.0
      %659 = vmatpush1.xpose.msra.mxu0 0.0
      %660 = vmatprep.subr.mxu0 0.0
      %661 = vmatpush1.xpose.msra.mxu0 0.0
      %662 = vmatprep.subr.mxu0 0.0
      %663 = vmatpush1.xpose.msra.mxu0 0.0
      %664 = vmatprep.subr.mxu0 0.0
      %665 = vmatpush1.xpose.msra.mxu0 0.0
      %666 = vmatprep.subr.mxu0 0.0
      %667 = vmatpush1.xpose.msra.mxu0 0.0
      %668 = vmatprep.subr.mxu0 0.0
      %669 = vmatpush1.xpose.msra.mxu0 0.0
      %670 = vmatprep.subr.mxu0 0.0
      %671 = vmatpush1.xpose.msra.mxu0 0.0
      %672 = vmatprep.subr.mxu0 0.0
      %673 = vmatpush1.xpose.msra.mxu0 0.0
      %674 = vmatprep.subr.mxu0 0.0
      %675 = vmatpush1.xpose.msra.mxu0 0.0
      %676 = vmatprep.subr.mxu0 0.0
      %677 = vmatpush1.xpose.msra.mxu0 0.0
      %678 = vmatprep.subr.mxu0 0.0
      %679 = vmatpush1.xpose.msra.mxu0 0.0
      %680 = vmatprep.subr.mxu0 0.0
      %681 = vmatpush1.xpose.msra.mxu0 0.0
      %682 = vmatprep.mubr.f32.mxu0 0.0
      %683 = vmatmul.mubr.f32.gmra.mrb[0].mxu0 %v614
      %v684 = vpop.f32.mrb[0].mxu0
      %v685 = vadd.f32 0.0, %v684
      %v686 = vpop.f32.mrb[0].mxu0
      %687 = vdwg.mxu0
      %v688 = vsel %vm117, %v685, -inf
      %689 = vmax.xlane.f32.xlu0 %v688
      %v690 = vpop.xlane.xlu0 %689
      %v691 = vsub.f32 %v685, %v690
      %v692 = vmul.f32 %v691, 1.442695
      %v693 = vpow.pop %v692
      %v694 = vsel %vm117, %v693, 0.0
      %695 = vadd.xlane.f32.xlu0 %v694
      %v696 = vpop.xlane.xlu0 %695
      %697 = vrot.lane.b32.xlu0 %v112, 40
      %v698 = vpop.permute.xlu0 %697
      %v701 = vsel %vm117, %v693, 0
      %703 = vmatprep.subr.mxu0 0.0
      %704 = vmatpush1.msra.mxu0 %v698
      %705 = vmatprep.subr.mxu0 0.0
      %706 = vmatpush1.msra.mxu0 0.0
      %707 = vmatprep.subr.mxu0 0.0
      %708 = vmatpush1.msra.mxu0 0.0
      %709 = vmatprep.subr.mxu0 0.0
      %710 = vmatpush1.msra.mxu0 0.0
      %711 = vmatprep.subr.mxu0 0.0
      %712 = vmatpush1.msra.mxu0 0.0
      %713 = vmatprep.subr.mxu0 0.0
      %714 = vmatpush1.msra.mxu0 0.0
      %715 = vmatprep.subr.mxu0 0.0
      %716 = vmatpush1.msra.mxu0 0.0
      %717 = vmatprep.subr.mxu0 0.0
      %718 = vmatpush1.msra.mxu0 0.0
      %719 = vmatprep.subr.mxu0 0.0
      %720 = vmatpush1.msra.mxu0 0.0
      %721 = vmatprep.subr.mxu0 0.0
      %722 = vmatpush1.msra.mxu0 0.0
      %723 = vmatprep.subr.mxu0 0.0
      %724 = vmatpush1.msra.mxu0 0.0
      %725 = vmatprep.subr.mxu0 0.0
      %726 = vmatpush1.msra.mxu0 0.0
      %727 = vmatprep.subr.mxu0 0.0
      %728 = vmatpush1.msra.mxu0 0.0
      %729 = vmatprep.subr.mxu0 0.0
      %730 = vmatpush1.msra.mxu0 0.0
      %731 = vmatprep.subr.mxu0 0.0
      %732 = vmatpush1.msra.mxu0 0.0
      %733 = vmatprep.subr.mxu0 0.0
      %734 = vmatpush1.msra.mxu0 0.0
      %735 = vmatprep.subr.mxu0 0.0
      %736 = vmatpush1.msra.mxu0 0.0
      %737 = vmatprep.subr.mxu0 0.0
      %738 = vmatpush1.msra.mxu0 0.0
      %739 = vmatprep.subr.mxu0 0.0
      %740 = vmatpush1.msra.mxu0 0.0
      %741 = vmatprep.subr.mxu0 0.0
      %742 = vmatpush1.msra.mxu0 0.0
      %743 = vmatprep.subr.mxu0 0.0
      %744 = vmatpush1.msra.mxu0 0.0
      %745 = vmatprep.subr.mxu0 0.0
      %746 = vmatpush1.msra.mxu0 0.0
      %747 = vmatprep.subr.mxu0 0.0
      %748 = vmatpush1.msra.mxu0 0.0
      %749 = vmatprep.subr.mxu0 0.0
      %750 = vmatpush1.msra.mxu0 0.0
      %751 = vmatprep.subr.mxu0 0.0
      %752 = vmatpush1.msra.mxu0 0.0
      %753 = vmatprep.subr.mxu0 0.0
      %754 = vmatpush1.msra.mxu0 0.0
      %755 = vmatprep.subr.mxu0 0.0
      %756 = vmatpush1.msra.mxu0 0.0
      %757 = vmatprep.subr.mxu0 0.0
      %758 = vmatpush1.msra.mxu0 0.0
      %759 = vmatprep.subr.mxu0 0.0
      %760 = vmatpush1.msra.mxu0 0.0
      %761 = vmatprep.subr.mxu0 0.0
      %762 = vmatpush1.msra.mxu0 0.0
      %763 = vmatprep.subr.mxu0 0.0
      %764 = vmatpush1.msra.mxu0 0.0
      %765 = vmatprep.subr.mxu0 0.0
      %766 = vmatpush1.msra.mxu0 0.0
      %767 = vmatprep.mubr.f32.mxu0 0.0
      %768 = vmatmul.mubr.f32.gmra.mrb[0].mxu0 %v701
      %v769 = vpop.f32.mrb[0].mxu0
      %v770 = vadd.f32 0.0, %v769
      %v771 = vpop.f32.mrb[0].mxu0
      %772 = vdwg.mxu0
      %v773 = vrcp.pop %v696
      %v774 = vmul.f32 %v770, %v773
      %776 = vrot.lane.b32.xlu0 %v444, 8
      %v777 = vpop.permute.xlu0 %776
      %780 = vrot.lane.b32.xlu0 %v609, 16
      %v781 = vpop.permute.xlu0 %780
      %784 = vrot.lane.b32.xlu0 %v774, 24
      %v785 = vpop.permute.xlu0 %784
      %v787 = vsel %vm117, %v279, %v777
      %vm788 = vcmask 130048
      %v789 = vsel %vm788, %v787, %v781
      %vm790 = vcmask 195584
      %v791 = vsel %vm790, %v789, %v785
      %vm792 = vcmask 261120
      %793 = vst.msk [vmem:[%s111] sm:$0xff] %vm792, %v791
      %p794 = scmp.lt.s32.totalorder %s12, 1
      %s795 = scalar_select %p794, %s12, 1
      %s796 = smul.addr %s795, 8
      %s797 = scalar_lea.vmem %s1, %s796
      // Predicated region
      $region25: #{_lambda_.6} parent=23 // pred_check
        %p798 = pneg %p56
      $region26: #{_lambda_.6} parent=23 // pred_check_branch
        %800 = sbr.rel (%p798) target = $region28
      $region27: #{_lambda_.6} parent=23 // pred_region
        _
      $region28: #{_lambda_.6} parent=23 // pred_fallthru
        _
    $region24: #{_lambda_.6} parent=5 // pred_fallthru
      _
    %p801 = scmp.le.s32.totalorder 2, %s7
    // Predicated region
    $region29: #{_lambda_.6} parent=5 // pred_check
      %p802 = pneg %p801
    $region30: #{_lambda_.6} parent=5 // pred_check_branch
      %804 = sbr.rel (%p802) target = $region32
    $region31: #{_lambda_.6} parent=5 // pred_region
      %s805 = ssub.s32 %s7, 2
      // Predicated region
      $region33: #{_lambda_.6} parent=31 // pred_check
        %p806 = pneg %p62
      $region34: #{_lambda_.6} parent=31 // pred_check_branch
        %808 = sbr.rel (%p806) target = $region36
      $region35: #{_lambda_.6} parent=31 // pred_region
        %p809 = scmp.lt.s32.totalorder %s13, 1
        %s810 = scalar_select %p809, %s13, 1
        %s811 = smul.addr %s810, 8
        %s812 = scalar_lea.vmem %s1, %s811
      $region36: #{_lambda_.6} parent=31 // pred_fallthru
        _
    $region32: #{_lambda_.6} parent=5 // pred_fallthru
      _
  $region6: #{_lambda_.6} parent=0 // loop_footer
    %s11 = sadd.s32 1, %s7
  $region7: #{_lambda_.6} parent=0 // loop_footer_branch
    %6 = sbr.rel target = $region3
  $region8: #{_lambda_.6} parent=0 // loop_exit
    _

// kernel: _lambda_.7
$region0: #{_lambda_.7}
  #allocation0 [shape = 'u32[]', space=smem, size = 0x4, offset = 0x4, fixed_abs, tag = 'smem constant byte address 0x4 - core index']
  #allocation1 [shape = 'u32[144,128]{1,0:T(1,128)}', space=vmem, size = 0x12000, scoped, tag = 'internal scratch']
  #allocation2 [shape = 'f32[16,32]{1,0:T(8,128)}', space=vmem, size = 0x2000, scoped, tag = 'scratch operand']
  %s0 = inlined_call_operand.vmem [shape: f32[16,32], index: 0, kind: input, shape index: {}]
  %s1 = inlined_call_operand.vmem [shape: f32[32,32], index: 1, kind: input, shape index: {}]
  %s2 = inlined_call_operand.vmem [shape: f32[1,32], index: 2, kind: input, shape index: {}]
  %s3 = inlined_call_operand.vmem [shape: f32[1,32], index: 3, kind: input, shape index: {}]
  %s4 = inlined_call_operand.vmem [shape: f32[16,32], index: 4, kind: input, shape index: {}]
  %s5 = inlined_call_operand.vmem [shape: f32[16,32], index: 5, kind: output, shape index: {}]
  %s6 = sld [smem:[#allocation0]]
  $region38: #{_lambda_.7} parent=0
    _
  %s8 = ssub.s32 1, %s6
  %s9 = scalar_select 0, %s8, %s6
  // Predicated region
  $region2: #{_lambda_.7} parent=0 // pred_check
    _
  $region3: #{_lambda_.7} parent=0 // pred_check_branch
    %11 = sbr.rel (0) target = $region5
  $region4: #{_lambda_.7} parent=0 // pred_region
    _
  $region5: #{_lambda_.7} parent=0 // pred_fallthru
    _
  // Predicated region
  $region6: #{_lambda_.7} parent=0 // pred_check
    _
  $region7: #{_lambda_.7} parent=0 // pred_check_branch
    %13 = sbr.rel (0) target = $region9
  $region8: #{_lambda_.7} parent=0 // pred_region
    _
  $region9: #{_lambda_.7} parent=0 // pred_fallthru
    _
  // Predicated region
  $region10: #{_lambda_.7} parent=0 // pred_check
    _
  $region11: #{_lambda_.7} parent=0 // pred_check_branch
    %15 = sbr.rel (0) target = $region13
  $region12: #{_lambda_.7} parent=0 // pred_region
    _
  $region13: #{_lambda_.7} parent=0 // pred_fallthru
    _
  // Predicated region
  $region14: #{_lambda_.7} parent=0 // pred_check
    _
  $region15: #{_lambda_.7} parent=0 // pred_check_branch
    %17 = sbr.rel (0) target = $region17
  $region16: #{_lambda_.7} parent=0 // pred_region
    _
  $region17: #{_lambda_.7} parent=0 // pred_fallthru
    _
  // Predicated region
  $region18: #{_lambda_.7} parent=0 // pred_check
    _
  $region19: #{_lambda_.7} parent=0 // pred_check_branch
    %19 = sbr.rel (0) target = $region21
  $region20: #{_lambda_.7} parent=0 // pred_region
    _
  $region21: #{_lambda_.7} parent=0 // pred_fallthru
    _
  %p20 = scmp.eq.s32.totalorder 0, 0
  // Predicated region
  $region22: #{_lambda_.7} parent=0 // pred_check
    %p21 = pneg %p20
  $region23: #{_lambda_.7} parent=0 // pred_check_branch
    %23 = sbr.rel (%p21) target = $region25
  $region24: #{_lambda_.7} parent=0 // pred_region
    %vm24 = vcmask 261120
    %25 = vst.msk [vmem:[#allocation2] sm:$0xff] %vm24, 0.0
    %26 = vst.msk [vmem:[#allocation2 + $0x8] sm:$0xff] %vm24, 0.0
  $region25: #{_lambda_.7} parent=0 // pred_fallthru
    _
  %v27 = vld [vmem:[%s0] sm:$0xff]
  %v28 = vld [vmem:[%s0 + $0x8] sm:$0xff]
  %v29 = vld [vmem:[#allocation2] sm:$0xff]
  %v30 = vld [vmem:[#allocation2 + $0x8] sm:$0xff]
  %v31 = vld [vmem:[%s1] sm:$0xff]
  %v32 = vld [vmem:[%s1 + $0x8] sm:$0xff]
  %v33 = vld [vmem:[%s1 + $0x10] sm:$0xff]
  %v34 = vld [vmem:[%s1 + $0x18] sm:$0xff]
  %vm35 = vcmask 261120
  %v37 = vsel %vm35, %v27, 0
  %v40 = vsel %vm35, %v28, 0
  %42 = vmatprep.subr.mxu0 0.0
  %43 = vmatpush1.msra.mxu0 %v31
  %44 = vmatprep.subr.mxu0 0.0
  %45 = vmatpush1.msra.mxu0 %v32
  %46 = vmatprep.subr.mxu0 0.0
  %47 = vmatpush1.msra.mxu0 %v33
  %48 = vmatprep.subr.mxu0 0.0
  %49 = vmatpush1.msra.mxu0 %v34
  %50 = vmatprep.subr.mxu0 0.0
  %51 = vmatpush1.msra.mxu0 0.0
  %52 = vmatprep.subr.mxu0 0.0
  %53 = vmatpush1.msra.mxu0 0.0
  %54 = vmatprep.subr.mxu0 0.0
  %55 = vmatpush1.msra.mxu0 0.0
  %56 = vmatprep.subr.mxu0 0.0
  %57 = vmatpush1.msra.mxu0 0.0
  %58 = vmatprep.subr.mxu0 0.0
  %59 = vmatpush1.msra.mxu0 0.0
  %60 = vmatprep.subr.mxu0 0.0
  %61 = vmatpush1.msra.mxu0 0.0
  %62 = vmatprep.subr.mxu0 0.0
  %63 = vmatpush1.msra.mxu0 0.0
  %64 = vmatprep.subr.mxu0 0.0
  %65 = vmatpush1.msra.mxu0 0.0
  %66 = vmatprep.subr.mxu0 0.0
  %67 = vmatpush1.msra.mxu0 0.0
  %68 = vmatprep.subr.mxu0 0.0
  %69 = vmatpush1.msra.mxu0 0.0
  %70 = vmatprep.subr.mxu0 0.0
  %71 = vmatpush1.msra.mxu0 0.0
  %72 = vmatprep.subr.mxu0 0.0
  %73 = vmatpush1.msra.mxu0 0.0
  %74 = vmatprep.subr.mxu0 0.0
  %75 = vmatpush1.msra.mxu0 0.0
  %76 = vmatprep.subr.mxu0 0.0
  %77 = vmatpush1.msra.mxu0 0.0
  %78 = vmatprep.subr.mxu0 0.0
  %79 = vmatpush1.msra.mxu0 0.0
  %80 = vmatprep.subr.mxu0 0.0
  %81 = vmatpush1.msra.mxu0 0.0
  %82 = vmatprep.subr.mxu0 0.0
  %83 = vmatpush1.msra.mxu0 0.0
  %84 = vmatprep.subr.mxu0 0.0
  %85 = vmatpush1.msra.mxu0 0.0
  %86 = vmatprep.subr.mxu0 0.0
  %87 = vmatpush1.msra.mxu0 0.0
  %88 = vmatprep.subr.mxu0 0.0
  %89 = vmatpush1.msra.mxu0 0.0
  %90 = vmatprep.subr.mxu0 0.0
  %91 = vmatpush1.msra.mxu0 0.0
  %92 = vmatprep.subr.mxu0 0.0
  %93 = vmatpush1.msra.mxu0 0.0
  %94 = vmatprep.subr.mxu0 0.0
  %95 = vmatpush1.msra.mxu0 0.0
  %96 = vmatprep.subr.mxu0 0.0
  %97 = vmatpush1.msra.mxu0 0.0
  %98 = vmatprep.subr.mxu0 0.0
  %99 = vmatpush1.msra.mxu0 0.0
  %100 = vmatprep.subr.mxu0 0.0
  %101 = vmatpush1.msra.mxu0 0.0
  %102 = vmatprep.subr.mxu0 0.0
  %103 = vmatpush1.msra.mxu0 0.0
  %104 = vmatprep.subr.mxu0 0.0
  %105 = vmatpush1.msra.mxu0 0.0
  %106 = vmatprep.mubr.f32.mxu0 0.0
  %107 = vmatmul.mubr.f32.gmra.mrb[0].mxu0 %v37
  %v108 = vpop.f32.mrb[0].mxu0
  %v109 = vadd.f32 0.0, %v108
  %v110 = vpop.f32.mrb[0].mxu0
  %111 = vmatprep.mubr.f32.mxu0 0.0
  %112 = vmatmul.mubr.f32.gmra.mrb[0].mxu0 %v40
  %v113 = vpop.f32.mrb[0].mxu0
  %v114 = vadd.f32 0.0, %v113
  %v115 = vpop.f32.mrb[0].mxu0
  %116 = vdwg.mxu0
  %v117 = vadd.f32 %v29, %v109
  %v118 = vadd.f32 %v30, %v114
  %119 = vst.msk [vmem:[#allocation2] sm:$0xff] %vm35, %v117
  %120 = vst.msk [vmem:[#allocation2 + $0x8] sm:$0xff] %vm35, %v118
  // Predicated region
  $region26: #{_lambda_.7} parent=0 // pred_check
    %p121 = pneg %p20
  $region27: #{_lambda_.7} parent=0 // pred_check_branch
    %123 = sbr.rel (%p121) target = $region29
  $region28: #{_lambda_.7} parent=0 // pred_region
    %v124 = vld [vmem:[#allocation2] sm:$0xff]
    %v125 = vld [vmem:[#allocation2 + $0x8] sm:$0xff]
    %v126 = vld [vmem:[%s2] sm:$0x1]
    %v128 = vlaneseq
    %v129 = vshrl.u32 %v128, 7
    %v130 = vsub.s32 0, %v129
    %v131 = vrot.slane %v126, %v130
    %v133 = vadd.f32 %v124, %v131
    %v134 = vadd.f32 %v125, %v131
    %v135 = vld [vmem:[%s3] sm:$0x1]
    %v137 = vlaneseq
    %v138 = vshrl.u32 %v137, 7
    %v139 = vsub.s32 0, %v138
    %v140 = vrot.slane %v135, %v139
    %v142 = vmul.f32 %v133, %v140
    %v143 = vmul.f32 %v134, %v140
    %v144 = vld [vmem:[%s4] sm:$0xff]
    %v145 = vld [vmem:[%s4 + $0x8] sm:$0xff]
    %v146 = vadd.f32 %v142, %v144
    %v147 = vadd.f32 %v143, %v145
    %148 = vst.msk [vmem:[%s5] sm:$0xff] %vm35, %v146
    %149 = vst.msk [vmem:[%s5 + $0x8] sm:$0xff] %vm35, %v147
  $region29: #{_lambda_.7} parent=0 // pred_fallthru
    _
  // Predicated region
  $region30: #{_lambda_.7} parent=0 // pred_check
    _
  $region31: #{_lambda_.7} parent=0 // pred_check_branch
    %151 = sbr.rel (0) target = $region33
  $region32: #{_lambda_.7} parent=0 // pred_region
    _
  $region33: #{_lambda_.7} parent=0 // pred_fallthru
    _
  // Predicated region
  $region34: #{_lambda_.7} parent=0 // pred_check
    _
  $region35: #{_lambda_.7} parent=0 // pred_check_branch
    %153 = sbr.rel (0) target = $region37
  $region36: #{_lambda_.7} parent=0 // pred_region
    _
  $region37: #{_lambda_.7} parent=0 // pred_fallthru
    _

// kernel: _lambda_.8
$region0: #{_lambda_.8}
  #allocation0 [shape = 'u32[]', space=smem, size = 0x4, offset = 0x4, fixed_abs, tag = 'smem constant byte address 0x4 - core index']
  #allocation1 [shape = 'u32[144,128]{1,0:T(1,128)}', space=vmem, size = 0x12000, scoped, tag = 'internal scratch']
  #allocation2 [shape = 'f32[16,128]{1,0:T(8,128)}', space=vmem, size = 0x2000, scoped, tag = 'scratch operand']
  %s0 = inlined_call_operand.vmem [shape: f32[16,32], index: 0, kind: input, shape index: {}]
  %s1 = inlined_call_operand.vmem [shape: f32[1,32], index: 1, kind: input, shape index: {}]
  %s2 = inlined_call_operand.vmem [shape: f32[1,32], index: 2, kind: input, shape index: {}]
  %s3 = inlined_call_operand.vmem [shape: f32[32,128], index: 3, kind: input, shape index: {}]
  %s4 = inlined_call_operand.vmem [shape: f32[1,128], index: 4, kind: input, shape index: {}]
  %s5 = inlined_call_operand.vmem [shape: f32[16,128], index: 5, kind: output, shape index: {}]
  %s6 = sld [smem:[#allocation0]]
  $region38: #{_lambda_.8} parent=0
    _
  %s8 = ssub.s32 1, %s6
  %s9 = scalar_select 0, %s8, %s6
  // Predicated region
  $region2: #{_lambda_.8} parent=0 // pred_check
    _
  $region3: #{_lambda_.8} parent=0 // pred_check_branch
    %11 = sbr.rel (0) target = $region5
  $region4: #{_lambda_.8} parent=0 // pred_region
    _
  $region5: #{_lambda_.8} parent=0 // pred_fallthru
    _
  // Predicated region
  $region6: #{_lambda_.8} parent=0 // pred_check
    _
  $region7: #{_lambda_.8} parent=0 // pred_check_branch
    %13 = sbr.rel (0) target = $region9
  $region8: #{_lambda_.8} parent=0 // pred_region
    _
  $region9: #{_lambda_.8} parent=0 // pred_fallthru
    _
  // Predicated region
  $region10: #{_lambda_.8} parent=0 // pred_check
    _
  $region11: #{_lambda_.8} parent=0 // pred_check_branch
    %15 = sbr.rel (0) target = $region13
  $region12: #{_lambda_.8} parent=0 // pred_region
    _
  $region13: #{_lambda_.8} parent=0 // pred_fallthru
    _
  // Predicated region
  $region14: #{_lambda_.8} parent=0 // pred_check
    _
  $region15: #{_lambda_.8} parent=0 // pred_check_branch
    %17 = sbr.rel (0) target = $region17
  $region16: #{_lambda_.8} parent=0 // pred_region
    _
  $region17: #{_lambda_.8} parent=0 // pred_fallthru
    _
  // Predicated region
  $region18: #{_lambda_.8} parent=0 // pred_check
    _
  $region19: #{_lambda_.8} parent=0 // pred_check_branch
    %19 = sbr.rel (0) target = $region21
  $region20: #{_lambda_.8} parent=0 // pred_region
    _
  $region21: #{_lambda_.8} parent=0 // pred_fallthru
    _
  %p20 = scmp.eq.s32.totalorder 0, 0
  // Predicated region
  $region22: #{_lambda_.8} parent=0 // pred_check
    %p21 = pneg %p20
  $region23: #{_lambda_.8} parent=0 // pred_check_branch
    %23 = sbr.rel (%p21) target = $region25
  $region24: #{_lambda_.8} parent=0 // pred_region
    %24 = vst [vmem:[#allocation2] sm:$0xff] 0.0
    %25 = vst [vmem:[#allocation2 + $0x8] sm:$0xff] 0.0
  $region25: #{_lambda_.8} parent=0 // pred_fallthru
    _
  %v26 = vld [vmem:[%s0] sm:$0xff]
  %v27 = vld [vmem:[%s0 + $0x8] sm:$0xff]
  %vm28 = vcmask 261120
  %v29 = vsel %vm28, %v26, 0.0
  %30 = vadd.xlane.f32.xlu0 %v29
  %v31 = vpop.xlane.xlu0 %30
  %v32 = vsel %vm28, %v27, 0.0
  %33 = vadd.xlane.f32.xlu0 %v32
  %v34 = vpop.xlane.xlu0 %33
  %v35 = vrcp.pop 32.0
  %v36 = vmul.f32 %v31, %v35
  %v37 = vmul.f32 %v34, %v35
  %v38 = vsub.f32 %v26, %v36
  %v39 = vsub.f32 %v27, %v37
  %v40 = vmul.f32 %v38, %v38
  %v41 = vmul.f32 %v39, %v39
  %v42 = vsel %vm28, %v40, 0.0
  %43 = vadd.xlane.f32.xlu0 %v42
  %v44 = vpop.xlane.xlu0 %43
  %v45 = vsel %vm28, %v41, 0.0
  %46 = vadd.xlane.f32.xlu0 %v45
  %v47 = vpop.xlane.xlu0 %46
  %v48 = vmul.f32 %v44, %v35
  %v49 = vmul.f32 %v47, %v35
  %v50 = vadd.f32 %v48, 1e-05
  %v51 = vadd.f32 %v49, 1e-05
  %v52 = vrsqrt.pop %v50
  %v53 = vrsqrt.pop %v51
  %v54 = vmul.f32 %v38, %v52
  %v55 = vmul.f32 %v39, %v53
  %v56 = vld [vmem:[%s1] sm:$0x1]
  %v58 = vlaneseq
  %v59 = vshrl.u32 %v58, 7
  %v60 = vsub.s32 0, %v59
  %v61 = vrot.slane %v56, %v60
  %v63 = vmul.f32 %v54, %v61
  %v64 = vmul.f32 %v55, %v61
  %v65 = vld [vmem:[%s2] sm:$0x1]
  %v67 = vlaneseq
  %v68 = vshrl.u32 %v67, 7
  %v69 = vsub.s32 0, %v68
  %v70 = vrot.slane %v65, %v69
  %v72 = vadd.f32 %v63, %v70
  %v73 = vadd.f32 %v64, %v70
  %v74 = vld [vmem:[#allocation2] sm:$0xff]
  %v75 = vld [vmem:[#allocation2 + $0x8] sm:$0xff]
  %v76 = vld [vmem:[%s3] sm:$0xff]
  %v77 = vld [vmem:[%s3 + $0x8] sm:$0xff]
  %v78 = vld [vmem:[%s3 + $0x10] sm:$0xff]
  %v79 = vld [vmem:[%s3 + $0x18] sm:$0xff]
  %v81 = vsel %vm28, %v72, 0
  %v84 = vsel %vm28, %v73, 0
  %86 = vmatprep.subr.mxu0 0.0
  %87 = vmatpush1.msra.mxu0 %v76
  %88 = vmatprep.subr.mxu0 0.0
  %89 = vmatpush1.msra.mxu0 %v77
  %90 = vmatprep.subr.mxu0 0.0
  %91 = vmatpush1.msra.mxu0 %v78
  %92 = vmatprep.subr.mxu0 0.0
  %93 = vmatpush1.msra.mxu0 %v79
  %94 = vmatprep.subr.mxu0 0.0
  %95 = vmatpush1.msra.mxu0 0.0
  %96 = vmatprep.subr.mxu0 0.0
  %97 = vmatpush1.msra.mxu0 0.0
  %98 = vmatprep.subr.mxu0 0.0
  %99 = vmatpush1.msra.mxu0 0.0
  %100 = vmatprep.subr.mxu0 0.0
  %101 = vmatpush1.msra.mxu0 0.0
  %102 = vmatprep.subr.mxu0 0.0
  %103 = vmatpush1.msra.mxu0 0.0
  %104 = vmatprep.subr.mxu0 0.0
  %105 = vmatpush1.msra.mxu0 0.0
  %106 = vmatprep.subr.mxu0 0.0
  %107 = vmatpush1.msra.mxu0 0.0
  %108 = vmatprep.subr.mxu0 0.0
  %109 = vmatpush1.msra.mxu0 0.0
  %110 = vmatprep.subr.mxu0 0.0
  %111 = vmatpush1.msra.mxu0 0.0
  %112 = vmatprep.subr.mxu0 0.0
  %113 = vmatpush1.msra.mxu0 0.0
  %114 = vmatprep.subr.mxu0 0.0
  %115 = vmatpush1.msra.mxu0 0.0
  %116 = vmatprep.subr.mxu0 0.0
  %117 = vmatpush1.msra.mxu0 0.0
  %118 = vmatprep.subr.mxu0 0.0
  %119 = vmatpush1.msra.mxu0 0.0
  %120 = vmatprep.subr.mxu0 0.0
  %121 = vmatpush1.msra.mxu0 0.0
  %122 = vmatprep.subr.mxu0 0.0
  %123 = vmatpush1.msra.mxu0 0.0
  %124 = vmatprep.subr.mxu0 0.0
  %125 = vmatpush1.msra.mxu0 0.0
  %126 = vmatprep.subr.mxu0 0.0
  %127 = vmatpush1.msra.mxu0 0.0
  %128 = vmatprep.subr.mxu0 0.0
  %129 = vmatpush1.msra.mxu0 0.0
  %130 = vmatprep.subr.mxu0 0.0
  %131 = vmatpush1.msra.mxu0 0.0
  %132 = vmatprep.subr.mxu0 0.0
  %133 = vmatpush1.msra.mxu0 0.0
  %134 = vmatprep.subr.mxu0 0.0
  %135 = vmatpush1.msra.mxu0 0.0
  %136 = vmatprep.subr.mxu0 0.0
  %137 = vmatpush1.msra.mxu0 0.0
  %138 = vmatprep.subr.mxu0 0.0
  %139 = vmatpush1.msra.mxu0 0.0
  %140 = vmatprep.subr.mxu0 0.0
  %141 = vmatpush1.msra.mxu0 0.0
  %142 = vmatprep.subr.mxu0 0.0
  %143 = vmatpush1.msra.mxu0 0.0
  %144 = vmatprep.subr.mxu0 0.0
  %145 = vmatpush1.msra.mxu0 0.0
  %146 = vmatprep.subr.mxu0 0.0
  %147 = vmatpush1.msra.mxu0 0.0
  %148 = vmatprep.subr.mxu0 0.0
  %149 = vmatpush1.msra.mxu0 0.0
  %150 = vmatprep.mubr.f32.mxu0 0.0
  %151 = vmatmul.mubr.f32.gmra.mrb[0].mxu0 %v81
  %v152 = vpop.f32.mrb[0].mxu0
  %v153 = vadd.f32 0.0, %v152
  %v154 = vpop.f32.mrb[0].mxu0
  %155 = vmatprep.mubr.f32.mxu0 0.0
  %156 = vmatmul.mubr.f32.gmra.mrb[0].mxu0 %v84
  %v157 = vpop.f32.mrb[0].mxu0
  %v158 = vadd.f32 0.0, %v157
  %v159 = vpop.f32.mrb[0].mxu0
  %160 = vdwg.mxu0
  %v161 = vadd.f32 %v74, %v153
  %v162 = vadd.f32 %v75, %v158
  %163 = vst [vmem:[#allocation2] sm:$0xff] %v161
  %164 = vst [vmem:[#allocation2 + $0x8] sm:$0xff] %v162
  // Predicated region
  $region26: #{_lambda_.8} parent=0 // pred_check
    %p165 = pneg %p20
  $region27: #{_lambda_.8} parent=0 // pred_check_branch
    %167 = sbr.rel (%p165) target = $region29
  $region28: #{_lambda_.8} parent=0 // pred_region
    %v168 = vld [vmem:[#allocation2] sm:$0xff]
    %v169 = vld [vmem:[#allocation2 + $0x8] sm:$0xff]
    %v170 = vld [vmem:[%s4] sm:$0x1]
    %v172 = vlaneseq
    %v173 = vshrl.u32 %v172, 7
    %v174 = vsub.s32 0, %v173
    %v175 = vrot.slane %v170, %v174
    %v177 = vadd.f32 %v168, %v175
    %v178 = vadd.f32 %v169, %v175
    %v179 = vmax.f32 %v177, 0.0
    %v180 = vmax.f32 %v178, 0.0
    %181 = vst [vmem:[%s5] sm:$0xff] %v179
    %182 = vst [vmem:[%s5 + $0x8] sm:$0xff] %v180
  $region29: #{_lambda_.8} parent=0 // pred_fallthru
    _
  // Predicated region
  $region30: #{_lambda_.8} parent=0 // pred_check
    _
  $region31: #{_lambda_.8} parent=0 // pred_check_branch
    %184 = sbr.rel (0) target = $region33
  $region32: #{_lambda_.8} parent=0 // pred_region
    _
  $region33: #{_lambda_.8} parent=0 // pred_fallthru
    _
  // Predicated region
  $region34: #{_lambda_.8} parent=0 // pred_check
    _
  $region35: #{_lambda_.8} parent=0 // pred_check_branch
    %186 = sbr.rel (0) target = $region37
  $region36: #{_lambda_.8} parent=0 // pred_region
    _
  $region37: #{_lambda_.8} parent=0 // pred_fallthru
    _

// kernel: _lambda_.9
$region0: #{_lambda_.9}
  #allocation0 [shape = 'u32[]', space=smem, size = 0x4, offset = 0x4, fixed_abs, tag = 'smem constant byte address 0x4 - core index']
  #allocation1 [shape = 'u32[144,128]{1,0:T(1,128)}', space=vmem, size = 0x12000, scoped, tag = 'internal scratch']
  #allocation2 [shape = 'f32[16,32]{1,0:T(8,128)}', space=vmem, size = 0x2000, scoped, tag = 'scratch operand']
  %s0 = inlined_call_operand.vmem [shape: f32[16,128], index: 0, kind: input, shape index: {}]
  %s1 = inlined_call_operand.vmem [shape: f32[128,32], index: 1, kind: input, shape index: {}]
  %s2 = inlined_call_operand.vmem [shape: f32[1,32], index: 2, kind: input, shape index: {}]
  %s3 = inlined_call_operand.vmem [shape: f32[16,32], index: 3, kind: input, shape index: {}]
  %s4 = inlined_call_operand.hbm [shape: f32[16,32], index: 4, kind: output, shape index: {}]
  %s5 = sld [smem:[#allocation0]]
  $region34: #{_lambda_.9} parent=0
    _
  %s7 = ssub.s32 1, %s5
  %s8 = scalar_select 0, %s7, %s5
  $region1: #{_lambda_.9} parent=0
    #allocation3 [shape = 'u8[8192]{0}', space=vmem, size = 0x2000, scoped, tag = 'output window, operand 0, single buffered']
    #allocation4 [shape = 's32[1]{0}', space=sflag, size = 0x4, scoped, tag = 'scoped memory for _lambda_.9']
    %9 = vsyncpa [#allocation4], 0
    // Predicated region
    $region2: #{_lambda_.9} parent=1 // pred_check
      _
    $region3: #{_lambda_.9} parent=1 // pred_check_branch
      %11 = sbr.rel (0) target = $region5
    $region4: #{_lambda_.9} parent=1 // pred_region
      _
    $region5: #{_lambda_.9} parent=1 // pred_fallthru
      _
    // Predicated region
    $region6: #{_lambda_.9} parent=1 // pred_check
      _
    $region7: #{_lambda_.9} parent=1 // pred_check_branch
      %13 = sbr.rel (0) target = $region9
    $region8: #{_lambda_.9} parent=1 // pred_region
      _
    $region9: #{_lambda_.9} parent=1 // pred_fallthru
      _
    // Predicated region
    $region10: #{_lambda_.9} parent=1 // pred_check
      _
    $region11: #{_lambda_.9} parent=1 // pred_check_branch
      %15 = sbr.rel (0) target = $region13
    $region12: #{_lambda_.9} parent=1 // pred_region
      _
    $region13: #{_lambda_.9} parent=1 // pred_fallthru
      _
    // Predicated region
    $region14: #{_lambda_.9} parent=1 // pred_check
      _
    $region15: #{_lambda_.9} parent=1 // pred_check_branch
      %17 = sbr.rel (0) target = $region17
    $region16: #{_lambda_.9} parent=1 // pred_region
      _
    $region17: #{_lambda_.9} parent=1 // pred_fallthru
      _
    %p18 = scmp.eq.s32.totalorder 0, 0
    // Predicated region
    $region18: #{_lambda_.9} parent=1 // pred_check
      %p19 = pneg %p18
    $region19: #{_lambda_.9} parent=1 // pred_check_branch
      %21 = sbr.rel (%p19) target = $region21
    $region20: #{_lambda_.9} parent=1 // pred_region
      %vm22 = vcmask 261120
      %23 = vst.msk [vmem:[#allocation2] sm:$0xff] %vm22, 0.0
      %24 = vst.msk [vmem:[#allocation2 + $0x8] sm:$0xff] %vm22, 0.0
    $region21: #{_lambda_.9} parent=1 // pred_fallthru
      _
    %v25 = vld [vmem:[%s0] sm:$0xff]
    %v26 = vld [vmem:[%s0 + $0x8] sm:$0xff]
    %v27 = vld [vmem:[#allocation2] sm:$0xff]
    %v28 = vld [vmem:[#allocation2 + $0x8] sm:$0xff]
    %v29 = vld [vmem:[%s1] sm:$0xff]
    %v30 = vld [vmem:[%s1 + $0x8] sm:$0xff]
    %v31 = vld [vmem:[%s1 + $0x10] sm:$0xff]
    %v32 = vld [vmem:[%s1 + $0x18] sm:$0xff]
    %v33 = vld [vmem:[%s1 + $0x20] sm:$0xff]
    %v34 = vld [vmem:[%s1 + $0x28] sm:$0xff]
    %v35 = vld [vmem:[%s1 + $0x30] sm:$0xff]
    %v36 = vld [vmem:[%s1 + $0x38] sm:$0xff]
    %v37 = vld [vmem:[%s1 + $0x40] sm:$0xff]
    %v38 = vld [vmem:[%s1 + $0x48] sm:$0xff]
    %v39 = vld [vmem:[%s1 + $0x50] sm:$0xff]
    %v40 = vld [vmem:[%s1 + $0x58] sm:$0xff]
    %v41 = vld [vmem:[%s1 + $0x60] sm:$0xff]
    %v42 = vld [vmem:[%s1 + $0x68] sm:$0xff]
    %v43 = vld [vmem:[%s1 + $0x70] sm:$0xff]
    %v44 = vld [vmem:[%s1 + $0x78] sm:$0xff]
    %45 = vmatprep.subr.mxu0 0.0
    %46 = vmatpush1.msra.mxu0 %v29
    %47 = vmatprep.subr.mxu0 0.0
    %48 = vmatpush1.msra.mxu0 %v30
    %49 = vmatprep.subr.mxu0 0.0
    %50 = vmatpush1.msra.mxu0 %v31
    %51 = vmatprep.subr.mxu0 0.0
    %52 = vmatpush1.msra.mxu0 %v32
    %53 = vmatprep.subr.mxu0 0.0
    %54 = vmatpush1.msra.mxu0 %v33
    %55 = vmatprep.subr.mxu0 0.0
    %56 = vmatpush1.msra.mxu0 %v34
    %57 = vmatprep.subr.mxu0 0.0
    %58 = vmatpush1.msra.mxu0 %v35
    %59 = vmatprep.subr.mxu0 0.0
    %60 = vmatpush1.msra.mxu0 %v36
    %61 = vmatprep.subr.mxu0 0.0
    %62 = vmatpush1.msra.mxu0 %v37
    %63 = vmatprep.subr.mxu0 0.0
    %64 = vmatpush1.msra.mxu0 %v38
    %65 = vmatprep.subr.mxu0 0.0
    %66 = vmatpush1.msra.mxu0 %v39
    %67 = vmatprep.subr.mxu0 0.0
    %68 = vmatpush1.msra.mxu0 %v40
    %69 = vmatprep.subr.mxu0 0.0
    %70 = vmatpush1.msra.mxu0 %v41
    %71 = vmatprep.subr.mxu0 0.0
    %72 = vmatpush1.msra.mxu0 %v42
    %73 = vmatprep.subr.mxu0 0.0
    %74 = vmatpush1.msra.mxu0 %v43
    %75 = vmatprep.subr.mxu0 0.0
    %76 = vmatpush1.msra.mxu0 %v44
    %77 = vmatprep.subr.mxu0 0.0
    %78 = vmatpush1.msra.mxu0 0.0
    %79 = vmatprep.subr.mxu0 0.0
    %80 = vmatpush1.msra.mxu0 0.0
    %81 = vmatprep.subr.mxu0 0.0
    %82 = vmatpush1.msra.mxu0 0.0
    %83 = vmatprep.subr.mxu0 0.0
    %84 = vmatpush1.msra.mxu0 0.0
    %85 = vmatprep.subr.mxu0 0.0
    %86 = vmatpush1.msra.mxu0 0.0
    %87 = vmatprep.subr.mxu0 0.0
    %88 = vmatpush1.msra.mxu0 0.0
    %89 = vmatprep.subr.mxu0 0.0
    %90 = vmatpush1.msra.mxu0 0.0
    %91 = vmatprep.subr.mxu0 0.0
    %92 = vmatpush1.msra.mxu0 0.0
    %93 = vmatprep.subr.mxu0 0.0
    %94 = vmatpush1.msra.mxu0 0.0
    %95 = vmatprep.subr.mxu0 0.0
    %96 = vmatpush1.msra.mxu0 0.0
    %97 = vmatprep.subr.mxu0 0.0
    %98 = vmatpush1.msra.mxu0 0.0
    %99 = vmatprep.subr.mxu0 0.0
    %100 = vmatpush1.msra.mxu0 0.0
    %101 = vmatprep.subr.mxu0 0.0
    %102 = vmatpush1.msra.mxu0 0.0
    %103 = vmatprep.subr.mxu0 0.0
    %104 = vmatpush1.msra.mxu0 0.0
    %105 = vmatprep.subr.mxu0 0.0
    %106 = vmatpush1.msra.mxu0 0.0
    %107 = vmatprep.subr.mxu0 0.0
    %108 = vmatpush1.msra.mxu0 0.0
    %109 = vmatprep.mubr.f32.mxu0 0.0
    %110 = vmatmul.mubr.f32.gmra.mrb[0].mxu0 %v25
    %v111 = vpop.f32.mrb[0].mxu0
    %v112 = vadd.f32 0.0, %v111
    %v113 = vpop.f32.mrb[0].mxu0
    %114 = vmatprep.mubr.f32.mxu0 0.0
    %115 = vmatmul.mubr.f32.gmra.mrb[0].mxu0 %v26
    %v116 = vpop.f32.mrb[0].mxu0
    %v117 = vadd.f32 0.0, %v116
    %v118 = vpop.f32.mrb[0].mxu0
    %119 = vdwg.mxu0
    %v120 = vadd.f32 %v27, %v112
    %v121 = vadd.f32 %v28, %v117
    %vm122 = vcmask 261120
    %123 = vst.msk [vmem:[#allocation2] sm:$0xff] %vm122, %v120
    %124 = vst.msk [vmem:[#allocation2 + $0x8] sm:$0xff] %vm122, %v121
    // Predicated region
    $region22: #{_lambda_.9} parent=1 // pred_check
      %p125 = pneg %p18
    $region23: #{_lambda_.9} parent=1 // pred_check_branch
      %127 = sbr.rel (%p125) target = $region25
    $region24: #{_lambda_.9} parent=1 // pred_region
      %v128 = vld [vmem:[#allocation2] sm:$0xff]
      %v129 = vld [vmem:[#allocation2 + $0x8] sm:$0xff]
      %v130 = vld [vmem:[%s2] sm:$0x1]
      %v132 = vlaneseq
      %v133 = vshrl.u32 %v132, 7
      %v134 = vsub.s32 0, %v133
      %v135 = vrot.slane %v130, %v134
      %v137 = vadd.f32 %v128, %v135
      %v138 = vadd.f32 %v129, %v135
      %v139 = vld [vmem:[%s3] sm:$0xff]
      %v140 = vld [vmem:[%s3 + $0x8] sm:$0xff]
      %v141 = vadd.f32 %v137, %v139
      %v142 = vadd.f32 %v138, %v140
      %143 = vst.msk [vmem:[#allocation3] sm:$0xff] %vm122, %v141
      %144 = vst.msk [vmem:[#allocation3 + $0x8] sm:$0xff] %vm122, %v142
    $region25: #{_lambda_.9} parent=1 // pred_fallthru
      _
    // Predicated region
    $region26: #{_lambda_.9} parent=1 // pred_check
      _
    $region27: #{_lambda_.9} parent=1 // pred_check_branch
      %146 = sbr.rel (0) target = $region29
    $region28: #{_lambda_.9} parent=1 // pred_region
      %s148 = ssub.s32 256, 256
      %149 = vsyncadd [#allocation4], %s148
      %s150 = sshll.u32 [#allocation3], 4
      %s151 = int_to_ptr.vmem [resolvable:$true] %s150
      %156 = dma.vmem_to_hbm [thread:$0]  %s151, 256, %s4, [#allocation4], 128, 128, 8
    $region29: #{_lambda_.9} parent=1 // pred_fallthru
      _
    // Predicated region
    $region30: #{_lambda_.9} parent=1 // pred_check
      _
    $region31: #{_lambda_.9} parent=1 // pred_check_branch
      %158 = sbr.rel (0) target = $region33
    $region32: #{_lambda_.9} parent=1 // pred_region
      %159 = dma.done [#allocation4], 256
    $region33: #{_lambda_.9} parent=1 // pred_fallthru
      _
    %160 = vsyncpa [#allocation4], 1

</llo_original>
